<compile_context>
chip_gen: v7x
topology: tpu7x:2x2x1
jax: 0.10.0
libtpu: 0.0.40
codegen_flags: <defaults>
</compile_context>

<pallas_src>
import math
import jax
import jax.numpy as jnp
from jax import lax
from jax.experimental import pallas as pl
from jax.experimental.pallas import tpu as pltpu

# ---- module hyper-parameters (SourceModuleHnNSF.__init__) ----
SAMPLING_RATE = 24000
UPSAMPLE_SCALE = 4
HARMONIC_NUM = 8
DIM = HARMONIC_NUM + 1          # fundamental + overtones
SINE_AMP = 0.1
NOISE_STD = 0.003
VOICED_THRESHOLD = 0.0
TWO_PI = 2.0 * math.pi
LANE = 128                      # TPU lane width; time axis is padded to this


def source_module_kernel(f0_ref, z_ref, w_ref, b_ref, out_ref):
    # f0_ref : (Bt, L) VMEM  f0 track, time-last (L padded to a multiple of 128)
    # z_ref  : (Bt, L) VMEM  N(0,1) prescaled by ||w||_2 (folded harmonic noise)
    # w_ref  : (DIM,)  SMEM  nn.Linear(DIM, 1) weight row
    # b_ref  : (1,)    SMEM  nn.Linear bias
    # out_ref: (Bt, L) VMEM  sine_merge
    L = f0_ref.shape[-1]
    f0 = f0_ref[...]                                              # (Bt, L)
    lane = lax.broadcasted_iota(jnp.int32, (1, 1, L), 2)          # time index

    inv_fs = 1.0 / SAMPLING_RATE
    # The x1/4 align_corners=False downsample only reads rad[4j+1] and rad[4j+2]
    # (input index 0 never contributes, so torch's rand_ini is a provable no-op).
    # Hoist the two time shifts to f0 before forming the 9 harmonics.
    f1 = jnp.roll(f0, -1, axis=-1) * inv_fs                       # f0[l+1]/fs
    f2 = jnp.roll(f0, -2, axis=-1) * inv_fs                       # f0[l+2]/fs

    # Harmonic slab (DIM, Bt, L): rad_k = (k*f0/fs) % 1, already 2-tap averaged.
    rows = []
    for kk in range(DIM):
        kf = float(kk + 1)
        a1 = kf * f1
        a2 = kf * f2
        rows.append(0.5 * ((a1 - jnp.floor(a1)) + (a2 - jnp.floor(a2))))
    rad_avg = jnp.stack(rows, axis=0)                             # (DIM, Bt, L)

    # Sparse downsampled frames on the full time grid: d[4j] = 0.5*(rad[4j+1]+rad[4j+2])
    d = jnp.where((lane % UPSAMPLE_SCALE) == 0, rad_avg, 0.0)

    # Inclusive prefix sum along lanes (Hillis-Steele).  Because the nonzeros sit
    # every 4th lane, the scan simultaneously yields the nearest-hold upsample:
    # cs[4m + r] == cumsum(d)[m] for r in 0..3.
    cs = d
    s = 1
    while s < L:
        cs = cs + jnp.where(lane >= s, jnp.roll(cs, s, axis=-1), 0.0)
        s *= 2

    # x4 linear upsample (align_corners=False) as a prev/cur/next blend.
    # Right-edge handling relies on the wrapper zero-padding the time axis
    # (padded cumsum holds the last real value == torch's edge clamp).
    prev_h = jnp.where(lane >= UPSAMPLE_SCALE,
                       jnp.roll(cs, UPSAMPLE_SCALE, axis=-1), cs)
    next_h = jnp.where(lane < L - UPSAMPLE_SCALE,
                       jnp.roll(cs, -UPSAMPLE_SCALE, axis=-1), cs)
    r = lane % UPSAMPLE_SCALE
    w_prev = jnp.where(r == 0, 0.375, jnp.where(r == 1, 0.125, 0.0))
    w_next = jnp.where(r == 2, 0.125, jnp.where(r == 3, 0.375, 0.0))
    phase = w_prev * prev_h + (1.0 - w_prev - w_next) * cs + w_next * next_h
    sines = jnp.sin(phase * (TWO_PI * UPSAMPLE_SCALE)) * SINE_AMP  # (DIM, Bt, L)
    # NOTE: phase is unwrapped (matches torch float32 behaviour); for very long
    # sequences consider frac()-range-reducing before the sin.

    # Linear(DIM -> 1): scalar-weighted reduce over the leading harmonic axis
    # (pure VPU broadcast-multiply-adds; an M=1 matmul would waste the MXU).
    acc = w_ref[0] * sines[0]
    for kk in range(1, DIM):
        acc = acc + w_ref[kk] * sines[kk]                          # (Bt, L)

    uv = (f0 > VOICED_THRESHOLD).astype(jnp.float32)               # (Bt, L)
    noise_amp = uv * NOISE_STD + (1.0 - uv) * (SINE_AMP / 3.0)
    # Folded per-harmonic noise: z_ref is N(0,1)*||w||_2, so noise_amp*z_ref is
    # exactly distributed as sum_k w_k * (noise_amp * z_k).
    out_ref[...] = jnp.tanh(acc * uv + noise_amp * z_ref[...] + b_ref[0])


def source_module_hn_nsf(f0_bl1, weight, bias, key, *, return_debug=False):
    """Forward of SourceModuleHnNSF.

    f0_bl1 : (B, L, 1) float32  fundamental-frequency track (x in the module)
    weight : (1, DIM)  float32  nn.Linear(DIM, 1) weight
    bias   : (1,)      float32  nn.Linear bias
    key    : jax PRNG key for the Gaussian noise
    returns (sine_merge, noise, uv), each (B, L, 1) float32
    """
    B, L, _ = f0_bl1.shape
    assert L % UPSAMPLE_SCALE == 0
    lpad = pl.cdiv(L, LANE) * LANE          # lane-dense time axis (mult. of 128 & 4)

    # Batch block size: fill sublanes for large B, but keep >= 2 grid steps so
    # both TensorCores on v7x get work (single-TC v5e/v6e don't care).
    bt = max(1, min(8, B // 2)) if B > 1 else 1
    nb = pl.cdiv(B, bt)
    bpad = nb * bt

    f0 = f0_bl1.reshape(B, L).astype(jnp.float32)               # trailing-1 reshape
    f0 = jnp.pad(f0, ((0, bpad - B), (0, lpad - L)))            # zero pad == unvoiced
    f0 = f0.reshape(nb, bt, lpad)

    k_merge, k_out = jax.random.split(key)
    w_row = weight.astype(jnp.float32).reshape(DIM)
    w_norm = jnp.sqrt(jnp.sum(w_row * w_row))
    # Single Gaussian row per sample, prescaled by ||w||_2 (noise folding).
    z = jax.random.normal(k_merge, (nb, bt, lpad), dtype=jnp.float32) * w_norm

    merged = pl.pallas_call(
        source_module_kernel,
        out_shape=jax.ShapeDtypeStruct((nb, bt, lpad), jnp.float32),
        grid=(nb,),
        in_specs=[
            pl.BlockSpec((None, bt, lpad), lambda b: (b, 0, 0)),         # f0
            pl.BlockSpec((None, bt, lpad), lambda b: (b, 0, 0)),         # z*||w||
            pl.BlockSpec(memory_space=pltpu.MemorySpace.SMEM),           # weight
            pl.BlockSpec(memory_space=pltpu.MemorySpace.SMEM),           # bias
        ],
        out_specs=pl.BlockSpec((None, bt, lpad), lambda b: (b, 0, 0)),
        compiler_params=pltpu.CompilerParams(
            dimension_semantics=("parallel",),
            vmem_limit_bytes=64 * 1024 * 1024),   # whole-L block; see TODO on tiling
    )(f0, z, w_row, bias.astype(jnp.float32))

    sine_merge = merged.reshape(bpad, lpad)[:B, :L].reshape(B, L, 1)
    # uv and the module-level output noise are trivial; produce them directly in
    # (B, L, 1) layout here instead of packing/unpacking extra kernel outputs.
    uv = (f0_bl1 > VOICED_THRESHOLD).astype(jnp.float32)
    noise = jax.random.normal(k_out, (B, L, 1), dtype=jnp.float32) * (SINE_AMP / 3.0)

    if return_debug:
        z_real = z.reshape(bpad, lpad)[:B, :L]          # for reference checking
        return (sine_merge, noise, uv), z_real
    return sine_merge, noise, uv


def _reference_merged(f0_bl, weight, bias, z_scaled_bl):
    """Pure-JAX replica of the torch math (interpolate/cumsum/interpolate/sin/
    linear/tanh) for validating the kernel; z_scaled_bl already includes ||w||."""
    B, L = f0_bl.shape
    M = L // UPSAMPLE_SCALE
    k = jnp.arange(1, DIM + 1, dtype=jnp.float32)
    rad = (f0_bl[:, None, :] * k[None, :, None] / SAMPLING_RATE) % 1.0   # (B,DIM,L)
    d = 0.5 * (rad[:, :, 1::4] + rad[:, :, 2::4])                        # (B,DIM,M)
    cum = jnp.cumsum(d, axis=-1)
    i = jnp.arange(L, dtype=jnp.float32)
    pos = (i + 0.5) / UPSAMPLE_SCALE - 0.5
    lo = jnp.clip(jnp.floor(pos), 0, M - 1).astype(jnp.int32)
    hi = jnp.clip(lo + 1, 0, M - 1)
    frac = jnp.clip(pos - lo.astype(jnp.float32), 0.0, 1.0)
    phase = cum[:, :, lo] * (1.0 - frac) + cum[:, :, hi] * frac
    sines = jnp.sin(phase * (TWO_PI * UPSAMPLE_SCALE)) * SINE_AMP
    uv = (f0_bl > VOICED_THRESHOLD).astype(jnp.float32)
    noise_amp = uv * NOISE_STD + (1.0 - uv) * (SINE_AMP / 3.0)
    w = weight.astype(jnp.float32).reshape(DIM)
    merged = jnp.einsum('d,bdl->bl', w, sines)
    return jnp.tanh(merged * uv + noise_amp * z_scaled_bl + bias[0])


if __name__ == "__main__":
    B, L = 2, 32
    key = jax.random.PRNGKey(0)
    k_f0, k_w, k_b, k_noise = jax.random.split(key, 4)

    # module input x: (B, L, 1) f0 track (0 => unvoiced)
    f0_bl1 = jax.random.uniform(k_f0, (B, L, 1), minval=0.0, maxval=400.0)
    f0_bl1 = jnp.where(f0_bl1 < 80.0, 0.0, f0_bl1).astype(jnp.float32)

    # nn.Linear(DIM, 1) parameters (PyTorch default-style uniform init)
    bound = 1.0 / math.sqrt(DIM)
    weight = jax.random.uniform(k_w, (1, DIM), minval=-bound, maxval=bound,
                                dtype=jnp.float32)
    bias = jax.random.uniform(k_b, (1,), minval=-bound, maxval=bound,
                              dtype=jnp.float32)

    (sine_merge, noise, uv), z_real = source_module_hn_nsf(
        f0_bl1, weight, bias, k_noise, return_debug=True)
    jax.block_until_ready((sine_merge, noise, uv))

    assert sine_merge.shape == (B, L, 1)
    assert noise.shape == (B, L, 1)
    assert uv.shape == (B, L, 1)
    assert bool(jnp.all(jnp.isfinite(sine_merge)))
    assert bool(jnp.all(jnp.isfinite(noise)))
    assert bool(jnp.all(jnp.abs(sine_merge) <= 1.0))            # tanh range
    uv_ref = (f0_bl1 > VOICED_THRESHOLD).astype(jnp.float32)
    assert bool(jnp.array_equal(uv, uv_ref))

    # Validate the kernel's sine/scan/upsample/linear path against a direct
    # jnp replica of the torch math using the exact same Gaussian draw.
    ref = _reference_merged(f0_bl1.reshape(B, L), weight, bias, z_real)
    assert bool(jnp.allclose(sine_merge.reshape(B, L), ref, atol=2e-4, rtol=2e-4))

    print("KERNEL_OK")
</pallas_src>

<mosaic_0001>
module attributes {stable_mosaic.version = 11 : i64} {
  func.func @source_module_kernel(%arg0: i32, %arg1: memref<1x1x128xf32, #tpu.memory_space<vmem>>, %arg2: memref<1x1x128xf32, #tpu.memory_space<vmem>>, %arg3: memref<9xf32, #tpu.memory_space<smem>>, %arg4: memref<1xf32, #tpu.memory_space<smem>>, %arg5: memref<1x1x128xf32, #tpu.memory_space<vmem>>) attributes {dimension_semantics = [#tpu.dimension_semantics<parallel>], iteration_bounds = array<i64: 2>, scalar_prefetch = 0 : i64, scratch_operands = 0 : i64, tpu.core_type = #tpu.core_type<tc>, window_params = [{transform_indices = @transform_0, window_bounds = array<i64: 1, 1, 128>}, {transform_indices = @transform_1, window_bounds = array<i64: 1, 1, 128>}, {transform_indices = @transform_2, window_bounds = array<i64: 9>}, {transform_indices = @transform_3, window_bounds = array<i64: 1>}, {transform_indices = @transform_4, window_bounds = array<i64: 1, 1, 128>}]} {
    %c0 = arith.constant 0 : index
    %c0_0 = arith.constant 0 : index
    %c0_1 = arith.constant 0 : index
    %0 = vector.load %arg1[%c0, %c0_0, %c0_1] : memref<1x1x128xf32, #tpu.memory_space<vmem>>, vector<1x1x128xf32>
    %1 = vector.shape_cast %0 : vector<1x1x128xf32> to vector<1x128xf32>
    %2 = tpu.iota {dimensions = array<i32: 2>} : vector<1x1x128xi32>
    %3 = vector.extract_strided_slice %1 {offsets = [0, 1], sizes = [1, 127], strides = [1, 1]} : vector<1x128xf32> to vector<1x127xf32>
    %4 = vector.extract_strided_slice %1 {offsets = [0, 0], sizes = [1, 1], strides = [1, 1]} : vector<1x128xf32> to vector<1x1xf32>
    %5 = tpu.concatenate %3, %4 in 1 : vector<1x127xf32>, vector<1x1xf32> -> vector<1x128xf32>
    %cst = arith.constant 4.16666662E-5 : f32
    %6 = vector.broadcast %cst : f32 to vector<1x128xf32>
    %7 = arith.mulf %5, %6 : vector<1x128xf32>
    %8 = vector.extract_strided_slice %1 {offsets = [0, 2], sizes = [1, 126], strides = [1, 1]} : vector<1x128xf32> to vector<1x126xf32>
    %9 = vector.extract_strided_slice %1 {offsets = [0, 0], sizes = [1, 2], strides = [1, 1]} : vector<1x128xf32> to vector<1x2xf32>
    %10 = tpu.concatenate %8, %9 in 1 : vector<1x126xf32>, vector<1x2xf32> -> vector<1x128xf32>
    %cst_2 = arith.constant 4.16666662E-5 : f32
    %11 = vector.broadcast %cst_2 : f32 to vector<1x128xf32>
    %12 = arith.mulf %10, %11 : vector<1x128xf32>
    %cst_3 = arith.constant 1.000000e+00 : f32
    %13 = vector.broadcast %cst_3 : f32 to vector<1x128xf32>
    %14 = arith.mulf %13, %7 : vector<1x128xf32>
    %cst_4 = arith.constant 1.000000e+00 : f32
    %15 = vector.broadcast %cst_4 : f32 to vector<1x128xf32>
    %16 = arith.mulf %15, %12 : vector<1x128xf32>
    %17 = math.floor %14 : vector<1x128xf32>
    %18 = arith.subf %14, %17 : vector<1x128xf32>
    %19 = math.floor %16 : vector<1x128xf32>
    %20 = arith.subf %16, %19 : vector<1x128xf32>
    %21 = arith.addf %18, %20 : vector<1x128xf32>
    %cst_5 = arith.constant 5.000000e-01 : f32
    %22 = vector.broadcast %cst_5 : f32 to vector<1x128xf32>
    %23 = arith.mulf %22, %21 : vector<1x128xf32>
    %cst_6 = arith.constant 2.000000e+00 : f32
    %24 = vector.broadcast %cst_6 : f32 to vector<1x128xf32>
    %25 = arith.mulf %24, %7 : vector<1x128xf32>
    %cst_7 = arith.constant 2.000000e+00 : f32
    %26 = vector.broadcast %cst_7 : f32 to vector<1x128xf32>
    %27 = arith.mulf %26, %12 : vector<1x128xf32>
    %28 = math.floor %25 : vector<1x128xf32>
    %29 = arith.subf %25, %28 : vector<1x128xf32>
    %30 = math.floor %27 : vector<1x128xf32>
    %31 = arith.subf %27, %30 : vector<1x128xf32>
    %32 = arith.addf %29, %31 : vector<1x128xf32>
    %cst_8 = arith.constant 5.000000e-01 : f32
    %33 = vector.broadcast %cst_8 : f32 to vector<1x128xf32>
    %34 = arith.mulf %33, %32 : vector<1x128xf32>
    %cst_9 = arith.constant 3.000000e+00 : f32
    %35 = vector.broadcast %cst_9 : f32 to vector<1x128xf32>
    %36 = arith.mulf %35, %7 : vector<1x128xf32>
    %cst_10 = arith.constant 3.000000e+00 : f32
    %37 = vector.broadcast %cst_10 : f32 to vector<1x128xf32>
    %38 = arith.mulf %37, %12 : vector<1x128xf32>
    %39 = math.floor %36 : vector<1x128xf32>
    %40 = arith.subf %36, %39 : vector<1x128xf32>
    %41 = math.floor %38 : vector<1x128xf32>
    %42 = arith.subf %38, %41 : vector<1x128xf32>
    %43 = arith.addf %40, %42 : vector<1x128xf32>
    %cst_11 = arith.constant 5.000000e-01 : f32
    %44 = vector.broadcast %cst_11 : f32 to vector<1x128xf32>
    %45 = arith.mulf %44, %43 : vector<1x128xf32>
    %cst_12 = arith.constant 4.000000e+00 : f32
    %46 = vector.broadcast %cst_12 : f32 to vector<1x128xf32>
    %47 = arith.mulf %46, %7 : vector<1x128xf32>
    %cst_13 = arith.constant 4.000000e+00 : f32
    %48 = vector.broadcast %cst_13 : f32 to vector<1x128xf32>
    %49 = arith.mulf %48, %12 : vector<1x128xf32>
    %50 = math.floor %47 : vector<1x128xf32>
    %51 = arith.subf %47, %50 : vector<1x128xf32>
    %52 = math.floor %49 : vector<1x128xf32>
    %53 = arith.subf %49, %52 : vector<1x128xf32>
    %54 = arith.addf %51, %53 : vector<1x128xf32>
    %cst_14 = arith.constant 5.000000e-01 : f32
    %55 = vector.broadcast %cst_14 : f32 to vector<1x128xf32>
    %56 = arith.mulf %55, %54 : vector<1x128xf32>
    %cst_15 = arith.constant 5.000000e+00 : f32
    %57 = vector.broadcast %cst_15 : f32 to vector<1x128xf32>
    %58 = arith.mulf %57, %7 : vector<1x128xf32>
    %cst_16 = arith.constant 5.000000e+00 : f32
    %59 = vector.broadcast %cst_16 : f32 to vector<1x128xf32>
    %60 = arith.mulf %59, %12 : vector<1x128xf32>
    %61 = math.floor %58 : vector<1x128xf32>
    %62 = arith.subf %58, %61 : vector<1x128xf32>
    %63 = math.floor %60 : vector<1x128xf32>
    %64 = arith.subf %60, %63 : vector<1x128xf32>
    %65 = arith.addf %62, %64 : vector<1x128xf32>
    %cst_17 = arith.constant 5.000000e-01 : f32
    %66 = vector.broadcast %cst_17 : f32 to vector<1x128xf32>
    %67 = arith.mulf %66, %65 : vector<1x128xf32>
    %cst_18 = arith.constant 6.000000e+00 : f32
    %68 = vector.broadcast %cst_18 : f32 to vector<1x128xf32>
    %69 = arith.mulf %68, %7 : vector<1x128xf32>
    %cst_19 = arith.constant 6.000000e+00 : f32
    %70 = vector.broadcast %cst_19 : f32 to vector<1x128xf32>
    %71 = arith.mulf %70, %12 : vector<1x128xf32>
    %72 = math.floor %69 : vector<1x128xf32>
    %73 = arith.subf %69, %72 : vector<1x128xf32>
    %74 = math.floor %71 : vector<1x128xf32>
    %75 = arith.subf %71, %74 : vector<1x128xf32>
    %76 = arith.addf %73, %75 : vector<1x128xf32>
    %cst_20 = arith.constant 5.000000e-01 : f32
    %77 = vector.broadcast %cst_20 : f32 to vector<1x128xf32>
    %78 = arith.mulf %77, %76 : vector<1x128xf32>
    %cst_21 = arith.constant 7.000000e+00 : f32
    %79 = vector.broadcast %cst_21 : f32 to vector<1x128xf32>
    %80 = arith.mulf %79, %7 : vector<1x128xf32>
    %cst_22 = arith.constant 7.000000e+00 : f32
    %81 = vector.broadcast %cst_22 : f32 to vector<1x128xf32>
    %82 = arith.mulf %81, %12 : vector<1x128xf32>
    %83 = math.floor %80 : vector<1x128xf32>
    %84 = arith.subf %80, %83 : vector<1x128xf32>
    %85 = math.floor %82 : vector<1x128xf32>
    %86 = arith.subf %82, %85 : vector<1x128xf32>
    %87 = arith.addf %84, %86 : vector<1x128xf32>
    %cst_23 = arith.constant 5.000000e-01 : f32
    %88 = vector.broadcast %cst_23 : f32 to vector<1x128xf32>
    %89 = arith.mulf %88, %87 : vector<1x128xf32>
    %cst_24 = arith.constant 8.000000e+00 : f32
    %90 = vector.broadcast %cst_24 : f32 to vector<1x128xf32>
    %91 = arith.mulf %90, %7 : vector<1x128xf32>
    %cst_25 = arith.constant 8.000000e+00 : f32
    %92 = vector.broadcast %cst_25 : f32 to vector<1x128xf32>
    %93 = arith.mulf %92, %12 : vector<1x128xf32>
    %94 = math.floor %91 : vector<1x128xf32>
    %95 = arith.subf %91, %94 : vector<1x128xf32>
    %96 = math.floor %93 : vector<1x128xf32>
    %97 = arith.subf %93, %96 : vector<1x128xf32>
    %98 = arith.addf %95, %97 : vector<1x128xf32>
    %cst_26 = arith.constant 5.000000e-01 : f32
    %99 = vector.broadcast %cst_26 : f32 to vector<1x128xf32>
    %100 = arith.mulf %99, %98 : vector<1x128xf32>
    %cst_27 = arith.constant 9.000000e+00 : f32
    %101 = vector.broadcast %cst_27 : f32 to vector<1x128xf32>
    %102 = arith.mulf %101, %7 : vector<1x128xf32>
    %cst_28 = arith.constant 9.000000e+00 : f32
    %103 = vector.broadcast %cst_28 : f32 to vector<1x128xf32>
    %104 = arith.mulf %103, %12 : vector<1x128xf32>
    %105 = math.floor %102 : vector<1x128xf32>
    %106 = arith.subf %102, %105 : vector<1x128xf32>
    %107 = math.floor %104 : vector<1x128xf32>
    %108 = arith.subf %104, %107 : vector<1x128xf32>
    %109 = arith.addf %106, %108 : vector<1x128xf32>
    %cst_29 = arith.constant 5.000000e-01 : f32
    %110 = vector.broadcast %cst_29 : f32 to vector<1x128xf32>
    %111 = arith.mulf %110, %109 : vector<1x128xf32>
    %112 = vector.shape_cast %23 : vector<1x128xf32> to vector<1x1x128xf32>
    %113 = vector.shape_cast %34 : vector<1x128xf32> to vector<1x1x128xf32>
    %114 = vector.shape_cast %45 : vector<1x128xf32> to vector<1x1x128xf32>
    %115 = vector.shape_cast %56 : vector<1x128xf32> to vector<1x1x128xf32>
    %116 = vector.shape_cast %67 : vector<1x128xf32> to vector<1x1x128xf32>
    %117 = vector.shape_cast %78 : vector<1x128xf32> to vector<1x1x128xf32>
    %118 = vector.shape_cast %89 : vector<1x128xf32> to vector<1x1x128xf32>
    %119 = vector.shape_cast %100 : vector<1x128xf32> to vector<1x1x128xf32>
    %120 = vector.shape_cast %111 : vector<1x128xf32> to vector<1x1x128xf32>
    %121 = tpu.concatenate %112, %113, %114, %115, %116, %117, %118, %119, %120 in 0 : vector<1x1x128xf32>, vector<1x1x128xf32>, vector<1x1x128xf32>, vector<1x1x128xf32>, vector<1x1x128xf32>, vector<1x1x128xf32>, vector<1x1x128xf32>, vector<1x1x128xf32>, vector<1x1x128xf32> -> vector<9x1x128xf32>
    %c4_i32 = arith.constant 4 : i32
    %c0_i32 = arith.constant 0 : i32
    %122 = arith.cmpi eq, %c4_i32, %c0_i32 : i32
    %c1_i32 = arith.constant 1 : i32
    %123 = arith.select %122, %c1_i32, %c4_i32 : i32
    %124 = vector.broadcast %123 : i32 to vector<1x1x128xi32>
    %125 = arith.remsi %2, %124 : vector<1x1x128xi32>
    %c0_i32_30 = arith.constant 0 : i32
    %126 = vector.broadcast %c0_i32_30 : i32 to vector<1x1x128xi32>
    %127 = arith.cmpi ne, %125, %126 : vector<1x1x128xi32>
    %c0_i32_31 = arith.constant 0 : i32
    %128 = vector.broadcast %c0_i32_31 : i32 to vector<1x1x128xi32>
    %129 = arith.cmpi slt, %125, %128 : vector<1x1x128xi32>
    %c0_i32_32 = arith.constant 0 : i32
    %130 = arith.cmpi slt, %123, %c0_i32_32 : i32
    %131 = vector.broadcast %130 : i1 to vector<1x1x128xi1>
    %132 = vector.broadcast %131 : vector<1x1x128xi1> to vector<1x1x128xi1>
    %133 = arith.xori %129, %132 : vector<1x1x128xi1>
    %134 = arith.andi %133, %127 : vector<1x1x128xi1>
    %135 = vector.broadcast %123 : i32 to vector<1x1x128xi32>
    %136 = arith.addi %125, %135 : vector<1x1x128xi32>
    %137 = arith.select %134, %136, %125 : vector<1x1x128xi1>, vector<1x1x128xi32>
    %c0_i32_33 = arith.constant 0 : i32
    %138 = vector.broadcast %c0_i32_33 : i32 to vector<1x1x128xi32>
    %139 = arith.cmpi eq, %137, %138 : vector<1x1x128xi32>
    %cst_34 = arith.constant 0.000000e+00 : f32
    %140 = vector.shape_cast %139 : vector<1x1x128xi1> to vector<1x1x128xi1>
    %141 = vector.broadcast %140 : vector<1x1x128xi1> to vector<9x1x128xi1>
    %142 = vector.broadcast %cst_34 : f32 to vector<9x1x128xf32>
    %143 = arith.select %141, %121, %142 : vector<9x1x128xi1>, vector<9x1x128xf32>
    %c1_i32_35 = arith.constant 1 : i32
    %144 = vector.broadcast %c1_i32_35 : i32 to vector<1x1x128xi32>
    %145 = arith.cmpi sge, %2, %144 : vector<1x1x128xi32>
    %146 = vector.extract_strided_slice %143 {offsets = [0, 0, 127], sizes = [9, 1, 1], strides = [1, 1, 1]} : vector<9x1x128xf32> to vector<9x1x1xf32>
    %147 = vector.extract_strided_slice %143 {offsets = [0, 0, 0], sizes = [9, 1, 127], strides = [1, 1, 1]} : vector<9x1x128xf32> to vector<9x1x127xf32>
    %148 = tpu.concatenate %146, %147 in 2 : vector<9x1x1xf32>, vector<9x1x127xf32> -> vector<9x1x128xf32>
    %cst_36 = arith.constant 0.000000e+00 : f32
    %149 = vector.shape_cast %145 : vector<1x1x128xi1> to vector<1x1x128xi1>
    %150 = vector.broadcast %149 : vector<1x1x128xi1> to vector<9x1x128xi1>
    %151 = vector.broadcast %cst_36 : f32 to vector<9x1x128xf32>
    %152 = arith.select %150, %148, %151 : vector<9x1x128xi1>, vector<9x1x128xf32>
    %153 = arith.addf %143, %152 : vector<9x1x128xf32>
    %c2_i32 = arith.constant 2 : i32
    %154 = vector.broadcast %c2_i32 : i32 to vector<1x1x128xi32>
    %155 = arith.cmpi sge, %2, %154 : vector<1x1x128xi32>
    %156 = vector.extract_strided_slice %153 {offsets = [0, 0, 126], sizes = [9, 1, 2], strides = [1, 1, 1]} : vector<9x1x128xf32> to vector<9x1x2xf32>
    %157 = vector.extract_strided_slice %153 {offsets = [0, 0, 0], sizes = [9, 1, 126], strides = [1, 1, 1]} : vector<9x1x128xf32> to vector<9x1x126xf32>
    %158 = tpu.concatenate %156, %157 in 2 : vector<9x1x2xf32>, vector<9x1x126xf32> -> vector<9x1x128xf32>
    %cst_37 = arith.constant 0.000000e+00 : f32
    %159 = vector.shape_cast %155 : vector<1x1x128xi1> to vector<1x1x128xi1>
    %160 = vector.broadcast %159 : vector<1x1x128xi1> to vector<9x1x128xi1>
    %161 = vector.broadcast %cst_37 : f32 to vector<9x1x128xf32>
    %162 = arith.select %160, %158, %161 : vector<9x1x128xi1>, vector<9x1x128xf32>
    %163 = arith.addf %153, %162 : vector<9x1x128xf32>
    %c4_i32_38 = arith.constant 4 : i32
    %164 = vector.broadcast %c4_i32_38 : i32 to vector<1x1x128xi32>
    %165 = arith.cmpi sge, %2, %164 : vector<1x1x128xi32>
    %166 = vector.extract_strided_slice %163 {offsets = [0, 0, 124], sizes = [9, 1, 4], strides = [1, 1, 1]} : vector<9x1x128xf32> to vector<9x1x4xf32>
    %167 = vector.extract_strided_slice %163 {offsets = [0, 0, 0], sizes = [9, 1, 124], strides = [1, 1, 1]} : vector<9x1x128xf32> to vector<9x1x124xf32>
    %168 = tpu.concatenate %166, %167 in 2 : vector<9x1x4xf32>, vector<9x1x124xf32> -> vector<9x1x128xf32>
    %cst_39 = arith.constant 0.000000e+00 : f32
    %169 = vector.shape_cast %165 : vector<1x1x128xi1> to vector<1x1x128xi1>
    %170 = vector.broadcast %169 : vector<1x1x128xi1> to vector<9x1x128xi1>
    %171 = vector.broadcast %cst_39 : f32 to vector<9x1x128xf32>
    %172 = arith.select %170, %168, %171 : vector<9x1x128xi1>, vector<9x1x128xf32>
    %173 = arith.addf %163, %172 : vector<9x1x128xf32>
    %c8_i32 = arith.constant 8 : i32
    %174 = vector.broadcast %c8_i32 : i32 to vector<1x1x128xi32>
    %175 = arith.cmpi sge, %2, %174 : vector<1x1x128xi32>
    %176 = vector.extract_strided_slice %173 {offsets = [0, 0, 120], sizes = [9, 1, 8], strides = [1, 1, 1]} : vector<9x1x128xf32> to vector<9x1x8xf32>
    %177 = vector.extract_strided_slice %173 {offsets = [0, 0, 0], sizes = [9, 1, 120], strides = [1, 1, 1]} : vector<9x1x128xf32> to vector<9x1x120xf32>
    %178 = tpu.concatenate %176, %177 in 2 : vector<9x1x8xf32>, vector<9x1x120xf32> -> vector<9x1x128xf32>
    %cst_40 = arith.constant 0.000000e+00 : f32
    %179 = vector.shape_cast %175 : vector<1x1x128xi1> to vector<1x1x128xi1>
    %180 = vector.broadcast %179 : vector<1x1x128xi1> to vector<9x1x128xi1>
    %181 = vector.broadcast %cst_40 : f32 to vector<9x1x128xf32>
    %182 = arith.select %180, %178, %181 : vector<9x1x128xi1>, vector<9x1x128xf32>
    %183 = arith.addf %173, %182 : vector<9x1x128xf32>
    %c16_i32 = arith.constant 16 : i32
    %184 = vector.broadcast %c16_i32 : i32 to vector<1x1x128xi32>
    %185 = arith.cmpi sge, %2, %184 : vector<1x1x128xi32>
    %186 = vector.extract_strided_slice %183 {offsets = [0, 0, 112], sizes = [9, 1, 16], strides = [1, 1, 1]} : vector<9x1x128xf32> to vector<9x1x16xf32>
    %187 = vector.extract_strided_slice %183 {offsets = [0, 0, 0], sizes = [9, 1, 112], strides = [1, 1, 1]} : vector<9x1x128xf32> to vector<9x1x112xf32>
    %188 = tpu.concatenate %186, %187 in 2 : vector<9x1x16xf32>, vector<9x1x112xf32> -> vector<9x1x128xf32>
    %cst_41 = arith.constant 0.000000e+00 : f32
    %189 = vector.shape_cast %185 : vector<1x1x128xi1> to vector<1x1x128xi1>
    %190 = vector.broadcast %189 : vector<1x1x128xi1> to vector<9x1x128xi1>
    %191 = vector.broadcast %cst_41 : f32 to vector<9x1x128xf32>
    %192 = arith.select %190, %188, %191 : vector<9x1x128xi1>, vector<9x1x128xf32>
    %193 = arith.addf %183, %192 : vector<9x1x128xf32>
    %c32_i32 = arith.constant 32 : i32
    %194 = vector.broadcast %c32_i32 : i32 to vector<1x1x128xi32>
    %195 = arith.cmpi sge, %2, %194 : vector<1x1x128xi32>
    %196 = vector.extract_strided_slice %193 {offsets = [0, 0, 96], sizes = [9, 1, 32], strides = [1, 1, 1]} : vector<9x1x128xf32> to vector<9x1x32xf32>
    %197 = vector.extract_strided_slice %193 {offsets = [0, 0, 0], sizes = [9, 1, 96], strides = [1, 1, 1]} : vector<9x1x128xf32> to vector<9x1x96xf32>
    %198 = tpu.concatenate %196, %197 in 2 : vector<9x1x32xf32>, vector<9x1x96xf32> -> vector<9x1x128xf32>
    %cst_42 = arith.constant 0.000000e+00 : f32
    %199 = vector.shape_cast %195 : vector<1x1x128xi1> to vector<1x1x128xi1>
    %200 = vector.broadcast %199 : vector<1x1x128xi1> to vector<9x1x128xi1>
    %201 = vector.broadcast %cst_42 : f32 to vector<9x1x128xf32>
    %202 = arith.select %200, %198, %201 : vector<9x1x128xi1>, vector<9x1x128xf32>
    %203 = arith.addf %193, %202 : vector<9x1x128xf32>
    %c64_i32 = arith.constant 64 : i32
    %204 = vector.broadcast %c64_i32 : i32 to vector<1x1x128xi32>
    %205 = arith.cmpi sge, %2, %204 : vector<1x1x128xi32>
    %206 = vector.extract_strided_slice %203 {offsets = [0, 0, 64], sizes = [9, 1, 64], strides = [1, 1, 1]} : vector<9x1x128xf32> to vector<9x1x64xf32>
    %207 = vector.extract_strided_slice %203 {offsets = [0, 0, 0], sizes = [9, 1, 64], strides = [1, 1, 1]} : vector<9x1x128xf32> to vector<9x1x64xf32>
    %208 = tpu.concatenate %206, %207 in 2 : vector<9x1x64xf32>, vector<9x1x64xf32> -> vector<9x1x128xf32>
    %cst_43 = arith.constant 0.000000e+00 : f32
    %209 = vector.shape_cast %205 : vector<1x1x128xi1> to vector<1x1x128xi1>
    %210 = vector.broadcast %209 : vector<1x1x128xi1> to vector<9x1x128xi1>
    %211 = vector.broadcast %cst_43 : f32 to vector<9x1x128xf32>
    %212 = arith.select %210, %208, %211 : vector<9x1x128xi1>, vector<9x1x128xf32>
    %213 = arith.addf %203, %212 : vector<9x1x128xf32>
    %c4_i32_44 = arith.constant 4 : i32
    %214 = vector.broadcast %c4_i32_44 : i32 to vector<1x1x128xi32>
    %215 = arith.cmpi sge, %2, %214 : vector<1x1x128xi32>
    %216 = vector.extract_strided_slice %213 {offsets = [0, 0, 124], sizes = [9, 1, 4], strides = [1, 1, 1]} : vector<9x1x128xf32> to vector<9x1x4xf32>
    %217 = vector.extract_strided_slice %213 {offsets = [0, 0, 0], sizes = [9, 1, 124], strides = [1, 1, 1]} : vector<9x1x128xf32> to vector<9x1x124xf32>
    %218 = tpu.concatenate %216, %217 in 2 : vector<9x1x4xf32>, vector<9x1x124xf32> -> vector<9x1x128xf32>
    %219 = vector.shape_cast %215 : vector<1x1x128xi1> to vector<1x1x128xi1>
    %220 = vector.broadcast %219 : vector<1x1x128xi1> to vector<9x1x128xi1>
    %221 = arith.select %220, %218, %213 : vector<9x1x128xi1>, vector<9x1x128xf32>
    %c124_i32 = arith.constant 124 : i32
    %222 = vector.broadcast %c124_i32 : i32 to vector<1x1x128xi32>
    %223 = arith.cmpi slt, %2, %222 : vector<1x1x128xi32>
    %224 = vector.extract_strided_slice %213 {offsets = [0, 0, 4], sizes = [9, 1, 124], strides = [1, 1, 1]} : vector<9x1x128xf32> to vector<9x1x124xf32>
    %225 = vector.extract_strided_slice %213 {offsets = [0, 0, 0], sizes = [9, 1, 4], strides = [1, 1, 1]} : vector<9x1x128xf32> to vector<9x1x4xf32>
    %226 = tpu.concatenate %224, %225 in 2 : vector<9x1x124xf32>, vector<9x1x4xf32> -> vector<9x1x128xf32>
    %227 = vector.shape_cast %223 : vector<1x1x128xi1> to vector<1x1x128xi1>
    %228 = vector.broadcast %227 : vector<1x1x128xi1> to vector<9x1x128xi1>
    %229 = arith.select %228, %226, %213 : vector<9x1x128xi1>, vector<9x1x128xf32>
    %c4_i32_45 = arith.constant 4 : i32
    %c0_i32_46 = arith.constant 0 : i32
    %230 = arith.cmpi eq, %c4_i32_45, %c0_i32_46 : i32
    %c1_i32_47 = arith.constant 1 : i32
    %231 = arith.select %230, %c1_i32_47, %c4_i32_45 : i32
    %232 = vector.broadcast %231 : i32 to vector<1x1x128xi32>
    %233 = arith.remsi %2, %232 : vector<1x1x128xi32>
    %c0_i32_48 = arith.constant 0 : i32
    %234 = vector.broadcast %c0_i32_48 : i32 to vector<1x1x128xi32>
    %235 = arith.cmpi ne, %233, %234 : vector<1x1x128xi32>
    %c0_i32_49 = arith.constant 0 : i32
    %236 = vector.broadcast %c0_i32_49 : i32 to vector<1x1x128xi32>
    %237 = arith.cmpi slt, %233, %236 : vector<1x1x128xi32>
    %c0_i32_50 = arith.constant 0 : i32
    %238 = arith.cmpi slt, %231, %c0_i32_50 : i32
    %239 = vector.broadcast %238 : i1 to vector<1x1x128xi1>
    %240 = vector.broadcast %239 : vector<1x1x128xi1> to vector<1x1x128xi1>
    %241 = arith.xori %237, %240 : vector<1x1x128xi1>
    %242 = arith.andi %241, %235 : vector<1x1x128xi1>
    %243 = vector.broadcast %231 : i32 to vector<1x1x128xi32>
    %244 = arith.addi %233, %243 : vector<1x1x128xi32>
    %245 = arith.select %242, %244, %233 : vector<1x1x128xi1>, vector<1x1x128xi32>
    %c0_i32_51 = arith.constant 0 : i32
    %246 = vector.broadcast %c0_i32_51 : i32 to vector<1x1x128xi32>
    %247 = arith.cmpi eq, %245, %246 : vector<1x1x128xi32>
    %c1_i32_52 = arith.constant 1 : i32
    %248 = vector.broadcast %c1_i32_52 : i32 to vector<1x1x128xi32>
    %249 = arith.cmpi eq, %245, %248 : vector<1x1x128xi32>
    %cst_53 = arith.constant 1.250000e-01 : f32
    %cst_54 = arith.constant 0.000000e+00 : f32
    %250 = vector.broadcast %cst_53 : f32 to vector<1x1x128xf32>
    %251 = vector.broadcast %cst_54 : f32 to vector<1x1x128xf32>
    %252 = arith.select %249, %250, %251 : vector<1x1x128xi1>, vector<1x1x128xf32>
    %cst_55 = arith.constant 3.750000e-01 : f32
    %253 = vector.broadcast %cst_55 : f32 to vector<1x1x128xf32>
    %254 = arith.select %247, %253, %252 : vector<1x1x128xi1>, vector<1x1x128xf32>
    %c2_i32_56 = arith.constant 2 : i32
    %255 = vector.broadcast %c2_i32_56 : i32 to vector<1x1x128xi32>
    %256 = arith.cmpi eq, %245, %255 : vector<1x1x128xi32>
    %c3_i32 = arith.constant 3 : i32
    %257 = vector.broadcast %c3_i32 : i32 to vector<1x1x128xi32>
    %258 = arith.cmpi eq, %245, %257 : vector<1x1x128xi32>
    %cst_57 = arith.constant 3.750000e-01 : f32
    %cst_58 = arith.constant 0.000000e+00 : f32
    %259 = vector.broadcast %cst_57 : f32 to vector<1x1x128xf32>
    %260 = vector.broadcast %cst_58 : f32 to vector<1x1x128xf32>
    %261 = arith.select %258, %259, %260 : vector<1x1x128xi1>, vector<1x1x128xf32>
    %cst_59 = arith.constant 1.250000e-01 : f32
    %262 = vector.broadcast %cst_59 : f32 to vector<1x1x128xf32>
    %263 = arith.select %256, %262, %261 : vector<1x1x128xi1>, vector<1x1x128xf32>
    %264 = vector.broadcast %254 : vector<1x1x128xf32> to vector<9x1x128xf32>
    %265 = arith.mulf %264, %221 : vector<9x1x128xf32>
    %cst_60 = arith.constant 1.000000e+00 : f32
    %266 = vector.broadcast %cst_60 : f32 to vector<1x1x128xf32>
    %267 = arith.subf %266, %254 : vector<1x1x128xf32>
    %268 = arith.subf %267, %263 : vector<1x1x128xf32>
    %269 = vector.broadcast %268 : vector<1x1x128xf32> to vector<9x1x128xf32>
    %270 = arith.mulf %269, %213 : vector<9x1x128xf32>
    %271 = arith.addf %265, %270 : vector<9x1x128xf32>
    %272 = vector.broadcast %263 : vector<1x1x128xf32> to vector<9x1x128xf32>
    %273 = arith.mulf %272, %229 : vector<9x1x128xf32>
    %274 = arith.addf %271, %273 : vector<9x1x128xf32>
    %cst_61 = arith.constant 25.1327419 : f32
    %275 = vector.broadcast %cst_61 : f32 to vector<9x1x128xf32>
    %276 = arith.mulf %274, %275 : vector<9x1x128xf32>
    %277 = math.sin %276 : vector<9x1x128xf32>
    %cst_62 = arith.constant 1.000000e-01 : f32
    %278 = vector.broadcast %cst_62 : f32 to vector<9x1x128xf32>
    %279 = arith.mulf %277, %278 : vector<9x1x128xf32>
    %c0_63 = arith.constant 0 : index
    %280 = memref.load %arg3[%c0_63] : memref<9xf32, #tpu.memory_space<smem>>
    %281 = vector.extract_strided_slice %279 {offsets = [0, 0, 0], sizes = [1, 1, 128], strides = [1, 1, 1]} : vector<9x1x128xf32> to vector<1x1x128xf32>
    %282 = vector.shape_cast %281 : vector<1x1x128xf32> to vector<1x128xf32>
    %283 = vector.broadcast %280 : f32 to vector<1x128xf32>
    %284 = arith.mulf %283, %282 : vector<1x128xf32>
    %c1 = arith.constant 1 : index
    %285 = memref.load %arg3[%c1] : memref<9xf32, #tpu.memory_space<smem>>
    %286 = vector.extract_strided_slice %279 {offsets = [1, 0, 0], sizes = [1, 1, 128], strides = [1, 1, 1]} : vector<9x1x128xf32> to vector<1x1x128xf32>
    %287 = vector.shape_cast %286 : vector<1x1x128xf32> to vector<1x128xf32>
    %288 = vector.broadcast %285 : f32 to vector<1x128xf32>
    %289 = arith.mulf %288, %287 : vector<1x128xf32>
    %290 = arith.addf %284, %289 : vector<1x128xf32>
    %c2 = arith.constant 2 : index
    %291 = memref.load %arg3[%c2] : memref<9xf32, #tpu.memory_space<smem>>
    %292 = vector.extract_strided_slice %279 {offsets = [2, 0, 0], sizes = [1, 1, 128], strides = [1, 1, 1]} : vector<9x1x128xf32> to vector<1x1x128xf32>
    %293 = vector.shape_cast %292 : vector<1x1x128xf32> to vector<1x128xf32>
    %294 = vector.broadcast %291 : f32 to vector<1x128xf32>
    %295 = arith.mulf %294, %293 : vector<1x128xf32>
    %296 = arith.addf %290, %295 : vector<1x128xf32>
    %c3 = arith.constant 3 : index
    %297 = memref.load %arg3[%c3] : memref<9xf32, #tpu.memory_space<smem>>
    %298 = vector.extract_strided_slice %279 {offsets = [3, 0, 0], sizes = [1, 1, 128], strides = [1, 1, 1]} : vector<9x1x128xf32> to vector<1x1x128xf32>
    %299 = vector.shape_cast %298 : vector<1x1x128xf32> to vector<1x128xf32>
    %300 = vector.broadcast %297 : f32 to vector<1x128xf32>
    %301 = arith.mulf %300, %299 : vector<1x128xf32>
    %302 = arith.addf %296, %301 : vector<1x128xf32>
    %c4 = arith.constant 4 : index
    %303 = memref.load %arg3[%c4] : memref<9xf32, #tpu.memory_space<smem>>
    %304 = vector.extract_strided_slice %279 {offsets = [4, 0, 0], sizes = [1, 1, 128], strides = [1, 1, 1]} : vector<9x1x128xf32> to vector<1x1x128xf32>
    %305 = vector.shape_cast %304 : vector<1x1x128xf32> to vector<1x128xf32>
    %306 = vector.broadcast %303 : f32 to vector<1x128xf32>
    %307 = arith.mulf %306, %305 : vector<1x128xf32>
    %308 = arith.addf %302, %307 : vector<1x128xf32>
    %c5 = arith.constant 5 : index
    %309 = memref.load %arg3[%c5] : memref<9xf32, #tpu.memory_space<smem>>
    %310 = vector.extract_strided_slice %279 {offsets = [5, 0, 0], sizes = [1, 1, 128], strides = [1, 1, 1]} : vector<9x1x128xf32> to vector<1x1x128xf32>
    %311 = vector.shape_cast %310 : vector<1x1x128xf32> to vector<1x128xf32>
    %312 = vector.broadcast %309 : f32 to vector<1x128xf32>
    %313 = arith.mulf %312, %311 : vector<1x128xf32>
    %314 = arith.addf %308, %313 : vector<1x128xf32>
    %c6 = arith.constant 6 : index
    %315 = memref.load %arg3[%c6] : memref<9xf32, #tpu.memory_space<smem>>
    %316 = vector.extract_strided_slice %279 {offsets = [6, 0, 0], sizes = [1, 1, 128], strides = [1, 1, 1]} : vector<9x1x128xf32> to vector<1x1x128xf32>
    %317 = vector.shape_cast %316 : vector<1x1x128xf32> to vector<1x128xf32>
    %318 = vector.broadcast %315 : f32 to vector<1x128xf32>
    %319 = arith.mulf %318, %317 : vector<1x128xf32>
    %320 = arith.addf %314, %319 : vector<1x128xf32>
    %c7 = arith.constant 7 : index
    %321 = memref.load %arg3[%c7] : memref<9xf32, #tpu.memory_space<smem>>
    %322 = vector.extract_strided_slice %279 {offsets = [7, 0, 0], sizes = [1, 1, 128], strides = [1, 1, 1]} : vector<9x1x128xf32> to vector<1x1x128xf32>
    %323 = vector.shape_cast %322 : vector<1x1x128xf32> to vector<1x128xf32>
    %324 = vector.broadcast %321 : f32 to vector<1x128xf32>
    %325 = arith.mulf %324, %323 : vector<1x128xf32>
    %326 = arith.addf %320, %325 : vector<1x128xf32>
    %c8 = arith.constant 8 : index
    %327 = memref.load %arg3[%c8] : memref<9xf32, #tpu.memory_space<smem>>
    %328 = vector.extract_strided_slice %279 {offsets = [8, 0, 0], sizes = [1, 1, 128], strides = [1, 1, 1]} : vector<9x1x128xf32> to vector<1x1x128xf32>
    %329 = vector.shape_cast %328 : vector<1x1x128xf32> to vector<1x128xf32>
    %330 = vector.broadcast %327 : f32 to vector<1x128xf32>
    %331 = arith.mulf %330, %329 : vector<1x128xf32>
    %332 = arith.addf %326, %331 : vector<1x128xf32>
    %cst_64 = arith.constant 0.000000e+00 : f32
    %333 = vector.broadcast %cst_64 : f32 to vector<1x128xf32>
    %334 = arith.cmpf ogt, %1, %333 : vector<1x128xf32>
    %335 = arith.extui %334 : vector<1x128xi1> to vector<1x128xi32>
    %336 = arith.sitofp %335 : vector<1x128xi32> to vector<1x128xf32>
    %cst_65 = arith.constant 3.000000e-03 : f32
    %337 = vector.broadcast %cst_65 : f32 to vector<1x128xf32>
    %338 = arith.mulf %336, %337 : vector<1x128xf32>
    %cst_66 = arith.constant 1.000000e+00 : f32
    %339 = vector.broadcast %cst_66 : f32 to vector<1x128xf32>
    %340 = arith.subf %339, %336 : vector<1x128xf32>
    %cst_67 = arith.constant 0.0333333351 : f32
    %341 = vector.broadcast %cst_67 : f32 to vector<1x128xf32>
    %342 = arith.mulf %340, %341 : vector<1x128xf32>
    %343 = arith.addf %338, %342 : vector<1x128xf32>
    %344 = arith.mulf %332, %336 : vector<1x128xf32>
    %c0_68 = arith.constant 0 : index
    %c0_69 = arith.constant 0 : index
    %c0_70 = arith.constant 0 : index
    %345 = vector.load %arg2[%c0_68, %c0_69, %c0_70] : memref<1x1x128xf32, #tpu.memory_space<vmem>>, vector<1x1x128xf32>
    %346 = vector.shape_cast %345 : vector<1x1x128xf32> to vector<1x128xf32>
    %347 = arith.mulf %343, %346 : vector<1x128xf32>
    %348 = arith.addf %344, %347 : vector<1x128xf32>
    %c0_71 = arith.constant 0 : index
    %349 = memref.load %arg4[%c0_71] : memref<1xf32, #tpu.memory_space<smem>>
    %350 = vector.broadcast %349 : f32 to vector<1x128xf32>
    %351 = arith.addf %348, %350 : vector<1x128xf32>
    %352 = math.tanh %351 : vector<1x128xf32>
    %c0_72 = arith.constant 0 : index
    %c0_73 = arith.constant 0 : index
    %c0_74 = arith.constant 0 : index
    %353 = vector.load %arg5[%c0_72, %c0_73, %c0_74] : memref<1x1x128xf32, #tpu.memory_space<vmem>>, vector<1x1x128xf32>
    %354 = vector.shape_cast %353 : vector<1x1x128xf32> to vector<1x128xf32>
    %355 = vector.shape_cast %352 : vector<1x128xf32> to vector<1x1x128xf32>
    tpu.vector_store %arg5[%c0_72, %c0_73, %c0_74], %355 {strides = array<i32>} : memref<1x1x128xf32, #tpu.memory_space<vmem>>, vector<1x1x128xf32>,
    return
  }
  func.func @transform_0(%arg0: i32) -> (i32, i32, i32) {
    %c0_i32 = arith.constant 0 : i32
    %c0_i32_0 = arith.constant 0 : i32
    %c0_i32_1 = arith.constant 0 : i32
    return %arg0, %c0_i32, %c0_i32_0 : i32, i32, i32
  }
  func.func @transform_1(%arg0: i32) -> (i32, i32, i32) {
    %c0_i32 = arith.constant 0 : i32
    %c0_i32_0 = arith.constant 0 : i32
    %c0_i32_1 = arith.constant 0 : i32
    return %arg0, %c0_i32, %c0_i32_0 : i32, i32, i32
  }
  func.func @transform_2(%arg0: i32) -> i32 {
    %c0_i32 = arith.constant 0 : i32
    %c0_i32_0 = arith.constant 0 : i32
    return %c0_i32 : i32
  }
  func.func @transform_3(%arg0: i32) -> i32 {
    %c0_i32 = arith.constant 0 : i32
    %c0_i32_0 = arith.constant 0 : i32
    return %c0_i32 : i32
  }
  func.func @transform_4(%arg0: i32) -> (i32, i32, i32) {
    %c0_i32 = arith.constant 0 : i32
    %c0_i32_0 = arith.constant 0 : i32
    %c0_i32_1 = arith.constant 0 : i32
    return %arg0, %c0_i32, %c0_i32_0 : i32, i32, i32
  }
}

</mosaic_0001>

<llo_original>
// kernel: tpu_custom_call.1
$region0: #{tpu_custom_call.1}
  #allocation0 [shape = 'u32[]', space=smem, size = 0x4, offset = 0x4, fixed_abs, tag = 'smem constant byte address 0x4 - core index']
  #allocation1 [shape = 'u32[144,128]{1,0:T(1,128)}', space=vmem, size = 0x12000, scoped, tag = 'internal scratch']
  #allocation2 [shape = 'f32[1]{0:T(128)S(6)}', space=smem, size = 0x200, scoped, tag = 'scoped memory for tpu_custom_call.1']
  %s0 = inlined_call_operand.hbm [shape: f32[2,1,128], index: 0, kind: input, shape index: {}]
  %s1 = inlined_call_operand.hbm [shape: f32[2,1,128], index: 1, kind: input, shape index: {}]
  %s2 = inlined_call_operand.hbm [shape: f32[9], index: 2, kind: input, shape index: {}]
  %s3 = inlined_call_operand.<no memory space> [shape: f32[1], index: 3, kind: input, shape index: {}]
  %s4 = inlined_call_operand.hbm [shape: f32[2,1,128], index: 4, kind: output, shape index: {}]
  %s5 = sld [smem:[#allocation0]]
  $region61: #{tpu_custom_call.1} parent=0
    _
  %s7 = ssub.s32 1, %s5
  %s8 = scalar_select 0, %s7, %s5
  %9 = sst [smem:[#allocation2]] %s3
  $region1: #{tpu_custom_call.1} parent=0
    #allocation3 [shape = 'u8[1024]{0}', space=vmem, size = 0x400, scoped, tag = 'input window, operand 0']
    #allocation4 [shape = 's32[2]{0}', space=sflag, size = 0x8, scoped, tag = 'scoped memory for tpu_custom_call.1']
    #allocation5 [shape = 's32[2]{0}', space=sflag, size = 0x8, scoped, tag = 'scoped memory for tpu_custom_call.1']
    #allocation6 [shape = 's32[2]{0}', space=sflag, size = 0x8, scoped, tag = 'scoped memory for tpu_custom_call.1']
    #allocation7 [shape = 'u8[1024]{0}', space=vmem, size = 0x400, scoped, tag = 'input window, operand 1']
    #allocation8 [shape = 's32[2]{0}', space=sflag, size = 0x8, scoped, tag = 'scoped memory for tpu_custom_call.1']
    #allocation9 [shape = 'u8[512]{0}', space=smem, size = 0x200, scoped, tag = 'input window, operand 2, single buffered']
    #allocation10 [shape = 'u8[1024]{0}', space=vmem, size = 0x400, scoped, tag = 'output window, operand 0']
    %10 = vsyncpa [#allocation4], 0
    %s11 = scalar_lea.sflag [#allocation4], 1
    %12 = vsyncpa %s11, 0
    %13 = vsyncpa [#allocation8], 0
    %s14 = scalar_lea.sflag [#allocation8], 1
    %15 = vsyncpa %s14, 0
    %16 = vsyncpa [#allocation6], 0
    %17 = vsyncpa [#allocation5], 0
    %s18 = scalar_lea.sflag [#allocation5], 1
    %19 = vsyncpa %s18, 0
    loop: start=0, step=1, limit=4
    $region2: #{tpu_custom_call.1} parent=1 // loop_pre_header
      _
    $region3: #{tpu_custom_call.1} parent=1 // loop_header
      %s21 = sphi 0, %s25
      %p22 = scmp.ge.s32.totalorder %s21, 4
      %s31 = sphi 0, %s33
      %s34 = sphi 0, %s31
      %s35 = sphi 0, %s34
      %s51 = sphi 0, %s35
      %s57 = sphi 0, %s59
      %s60 = sphi 0, %s57
      %s61 = sphi 0, %s60
      %s77 = sphi 0, %s61
      %s81 = sphi 0, %s81
      %s83 = sphi 0, %s81
      %s84 = sphi 0, %s83
      %s98 = sphi 0, %s84
      %s102 = sphi 0, %s102
      %s104 = sphi 0, %s102
      %s105 = sphi 0, %s104
      %s119 = sphi 0, %s105
      %s125 = sphi 0, %s127
      %s128 = sphi 0, %s125
      %s129 = sphi 0, %s128
      %s145 = sphi 0, %s129
    $region4: #{tpu_custom_call.1} parent=1 // loop_header_branch
      %24 = sbr.rel (%p22) target = $region8
    $region5: #{tpu_custom_call.1} parent=1 // loop_body
      %s26 = ssub.s32 %s21, 1
      %s27 = ssub.s32 %s21, 2
      %s28 = sadd.s32 %s21, 1
      %s29 = ssub.s32 %s21, %s28
      %p30 = scmp.eq.s32.totalorder %s29, 0
      %s32 = sadd.s32 %s31, 1
      %s33 = scalar_select %p30, %s31, %s32
      %p36 = pneg %p30
      %p37 = scmp.eq.s32.totalorder %s21, 1
      %p38 = por %p36, %p37
      %p39 = scmp.ne.s32.totalorder %s31, %s34
      %p40 = scmp.eq.s32.totalorder %s21, 0
      %p41 = por %p39, %p40
      %p42 = scmp.ne.s32.totalorder %s31, %s34
      %p43 = scmp.eq.s32.totalorder %s26, 1
      %p44 = por %p42, %p43
      %p45 = scmp.ne.s32.totalorder %s34, %s35
      %p46 = scmp.eq.s32.totalorder %s26, 0
      %p47 = por %p45, %p46
      %p48 = scmp.ne.s32.totalorder %s34, %s35
      %p49 = scmp.eq.s32.totalorder %s27, 1
      %p50 = por %p48, %p49
      %p52 = scmp.ne.s32.totalorder %s35, %s51
      %p53 = scmp.eq.s32.totalorder %s27, 0
      %p54 = por %p52, %p53
      %s55 = ssub.s32 %s21, %s28
      %p56 = scmp.eq.s32.totalorder %s55, 0
      %s58 = sadd.s32 %s57, 1
      %s59 = scalar_select %p56, %s57, %s58
      %p62 = pneg %p56
      %p63 = scmp.eq.s32.totalorder %s21, 1
      %p64 = por %p62, %p63
      %p65 = scmp.ne.s32.totalorder %s57, %s60
      %p66 = scmp.eq.s32.totalorder %s21, 0
      %p67 = por %p65, %p66
      %p68 = scmp.ne.s32.totalorder %s57, %s60
      %p69 = scmp.eq.s32.totalorder %s26, 1
      %p70 = por %p68, %p69
      %p71 = scmp.ne.s32.totalorder %s60, %s61
      %p72 = scmp.eq.s32.totalorder %s26, 0
      %p73 = por %p71, %p72
      %p74 = scmp.ne.s32.totalorder %s60, %s61
      %p75 = scmp.eq.s32.totalorder %s27, 1
      %p76 = por %p74, %p75
      %p78 = scmp.ne.s32.totalorder %s61, %s77
      %p79 = scmp.eq.s32.totalorder %s27, 0
      %p80 = por %p78, %p79
      %s82 = sadd.s32 %s81, 1
      %p85 = scmp.eq.s32.totalorder %s21, 1
      %p86 = scmp.ne.s32.totalorder %s81, %s83
      %p87 = scmp.eq.s32.totalorder %s21, 0
      %p88 = por %p86, %p87
      %p89 = scmp.ne.s32.totalorder %s81, %s83
      %p90 = scmp.eq.s32.totalorder %s26, 1
      %p91 = por %p89, %p90
      %p92 = scmp.ne.s32.totalorder %s83, %s84
      %p93 = scmp.eq.s32.totalorder %s26, 0
      %p94 = por %p92, %p93
      %p95 = scmp.ne.s32.totalorder %s83, %s84
      %p96 = scmp.eq.s32.totalorder %s27, 1
      %p97 = por %p95, %p96
      %p99 = scmp.ne.s32.totalorder %s84, %s98
      %p100 = scmp.eq.s32.totalorder %s27, 0
      %p101 = por %p99, %p100
      %s103 = sadd.s32 %s102, 1
      %p106 = scmp.eq.s32.totalorder %s21, 1
      %p107 = scmp.ne.s32.totalorder %s102, %s104
      %p108 = scmp.eq.s32.totalorder %s21, 0
      %p109 = por %p107, %p108
      %p110 = scmp.ne.s32.totalorder %s102, %s104
      %p111 = scmp.eq.s32.totalorder %s26, 1
      %p112 = por %p110, %p111
      %p113 = scmp.ne.s32.totalorder %s104, %s105
      %p114 = scmp.eq.s32.totalorder %s26, 0
      %p115 = por %p113, %p114
      %p116 = scmp.ne.s32.totalorder %s104, %s105
      %p117 = scmp.eq.s32.totalorder %s27, 1
      %p118 = por %p116, %p117
      %p120 = scmp.ne.s32.totalorder %s105, %s119
      %p121 = scmp.eq.s32.totalorder %s27, 0
      %p122 = por %p120, %p121
      %s123 = ssub.s32 %s21, %s28
      %p124 = scmp.eq.s32.totalorder %s123, 0
      %s126 = sadd.s32 %s125, 1
      %s127 = scalar_select %p124, %s125, %s126
      %p130 = pneg %p124
      %p131 = scmp.eq.s32.totalorder %s21, 1
      %p132 = por %p130, %p131
      %p133 = scmp.ne.s32.totalorder %s125, %s128
      %p134 = scmp.eq.s32.totalorder %s21, 0
      %p135 = por %p133, %p134
      %p136 = scmp.ne.s32.totalorder %s125, %s128
      %p137 = scmp.eq.s32.totalorder %s26, 1
      %p138 = por %p136, %p137
      %p139 = scmp.ne.s32.totalorder %s128, %s129
      %p140 = scmp.eq.s32.totalorder %s26, 0
      %p141 = por %p139, %p140
      %p142 = scmp.ne.s32.totalorder %s128, %s129
      %p143 = scmp.eq.s32.totalorder %s27, 1
      %p144 = por %p142, %p143
      %p146 = scmp.ne.s32.totalorder %s129, %s145
      %p147 = scmp.eq.s32.totalorder %s27, 0
      %p148 = por %p146, %p147
      %p149 = scmp.le.s32.totalorder 1, %s21
      %p150 = scmp.lt.s32.totalorder %s21, 3
      %p151 = pnand %p149, %p150
      %p152 = pneg %p151
      // Predicated region
      $region9: #{tpu_custom_call.1} parent=5 // pred_check
        _
      $region10: #{tpu_custom_call.1} parent=5 // pred_check_branch
        %154 = sbr.rel (%p151) target = $region12
      $region11: #{tpu_custom_call.1} parent=5 // pred_region
        %s155 = ssub.s32 %s21, 1
        // Predicated region
        $region13: #{tpu_custom_call.1} parent=11 // pred_check
          %p156 = pneg %p94
        $region14: #{tpu_custom_call.1} parent=11 // pred_check_branch
          %158 = sbr.rel (%p156) target = $region16
        $region15: #{tpu_custom_call.1} parent=11 // pred_region
          %s160 = ssub.s32 16, 16
          %161 = vsyncadd [#allocation6], %s160
          %164 = dma.hbm_to_smem %s2, 16, [#allocation9], [#allocation6]
        $region16: #{tpu_custom_call.1} parent=11 // pred_fallthru
          _
        // Predicated region
        $region17: #{tpu_custom_call.1} parent=11 // pred_check
          %p165 = pneg %p115
        $region18: #{tpu_custom_call.1} parent=11 // pred_check_branch
          %167 = sbr.rel (%p165) target = $region20
        $region19: #{tpu_custom_call.1} parent=11 // pred_region
          _
        $region20: #{tpu_custom_call.1} parent=11 // pred_fallthru
          _
      $region12: #{tpu_custom_call.1} parent=5 // pred_fallthru
        _
      %p168 = scmp.lt.s32.totalorder %s21, 2
      // Predicated region
      $region21: #{tpu_custom_call.1} parent=5 // pred_check
        %p169 = pneg %p168
      $region22: #{tpu_custom_call.1} parent=5 // pred_check_branch
        %171 = sbr.rel (%p169) target = $region24
      $region23: #{tpu_custom_call.1} parent=5 // pred_region
        // Predicated region
        $region25: #{tpu_custom_call.1} parent=23 // pred_check
          %p172 = pneg %p41
        $region26: #{tpu_custom_call.1} parent=23 // pred_check_branch
          %174 = sbr.rel (%p172) target = $region28
        $region27: #{tpu_custom_call.1} parent=23 // pred_region
          %s175 = sand.u32 %s31, 1
          %s176 = scalar_lea.sflag [#allocation4], %s175
          %s177 = sand.u32 %s31, 1
          %s178 = scalar_lea.vmem [#allocation3], %s177
          %s180 = ssub.s32 16, 16
          %181 = vsyncadd %s176, %s180
          %s182 = smul.addr %s21, 16
          %s183 = scalar_lea.hbm %s0, %s182
          %s185 = sshll.u32 %s178, 4
          %s186 = int_to_ptr.vmem [resolvable:$true] %s185
          %188 = dma.hbm_to_vmem [thread:$0]  %s183, 16, %s186, %s176
        $region28: #{tpu_custom_call.1} parent=23 // pred_fallthru
          _
        // Predicated region
        $region29: #{tpu_custom_call.1} parent=23 // pred_check
          %p189 = pneg %p67
        $region30: #{tpu_custom_call.1} parent=23 // pred_check_branch
          %191 = sbr.rel (%p189) target = $region32
        $region31: #{tpu_custom_call.1} parent=23 // pred_region
          %s192 = sand.u32 %s57, 1
          %s193 = scalar_lea.sflag [#allocation8], %s192
          %s194 = sand.u32 %s57, 1
          %s195 = scalar_lea.vmem [#allocation7], %s194
          %s197 = ssub.s32 16, 16
          %198 = vsyncadd %s193, %s197
          %s199 = smul.addr %s21, 16
          %s200 = scalar_lea.hbm %s1, %s199
          %s202 = sshll.u32 %s195, 4
          %s203 = int_to_ptr.vmem [resolvable:$true] %s202
          %205 = dma.hbm_to_vmem [thread:$0]  %s200, 16, %s203, %s193
        $region32: #{tpu_custom_call.1} parent=23 // pred_fallthru
          _
      $region24: #{tpu_custom_call.1} parent=5 // pred_fallthru
        _
      %p206 = scmp.le.s32.totalorder 1, %s21
      %p207 = scmp.lt.s32.totalorder %s21, 3
      %p208 = pnand %p206, %p207
      %p209 = pneg %p208
      // Predicated region
      $region33: #{tpu_custom_call.1} parent=5 // pred_check
        _
      $region34: #{tpu_custom_call.1} parent=5 // pred_check_branch
        %211 = sbr.rel (%p208) target = $region36
      $region35: #{tpu_custom_call.1} parent=5 // pred_region
        %s212 = ssub.s32 %s21, 1
        %s213 = sand.u32 %s34, 1
        %s214 = scalar_lea.sflag [#allocation4], %s213
        %s215 = sand.u32 %s34, 1
        %s216 = scalar_lea.vmem [#allocation3], %s215
        // Predicated region
        $region37: #{tpu_custom_call.1} parent=35 // pred_check
          %p217 = pneg %p47
        $region38: #{tpu_custom_call.1} parent=35 // pred_check_branch
          %219 = sbr.rel (%p217) target = $region40
        $region39: #{tpu_custom_call.1} parent=35 // pred_region
          %220 = dma.done %s214, 16
        $region40: #{tpu_custom_call.1} parent=35 // pred_fallthru
          _
        %s221 = sand.u32 %s60, 1
        %s222 = scalar_lea.sflag [#allocation8], %s221
        %s223 = sand.u32 %s60, 1
        %s224 = scalar_lea.vmem [#allocation7], %s223
        // Predicated region
        $region41: #{tpu_custom_call.1} parent=35 // pred_check
          %p225 = pneg %p73
        $region42: #{tpu_custom_call.1} parent=35 // pred_check_branch
          %227 = sbr.rel (%p225) target = $region44
        $region43: #{tpu_custom_call.1} parent=35 // pred_region
          %228 = dma.done %s222, 16
        $region44: #{tpu_custom_call.1} parent=35 // pred_fallthru
          _
        // Predicated region
        $region45: #{tpu_custom_call.1} parent=35 // pred_check
          %p229 = pneg %p94
        $region46: #{tpu_custom_call.1} parent=35 // pred_check_branch
          %231 = sbr.rel (%p229) target = $region48
        $region47: #{tpu_custom_call.1} parent=35 // pred_region
          %232 = dma.done [#allocation6], 16
        $region48: #{tpu_custom_call.1} parent=35 // pred_fallthru
          _
        %233 = sfence
        %s234 = sand.u32 %s34, 1
        %s235 = scalar_lea.sflag [#allocation4], %s234
        %s236 = sand.u32 %s34, 1
        %s237 = scalar_lea.vmem [#allocation3], %s236
        %p238 = pneg %p47
        %p239 = pneg %p44
        %s240 = sand.u32 %s60, 1
        %s241 = scalar_lea.sflag [#allocation8], %s240
        %s242 = sand.u32 %s60, 1
        %s243 = scalar_lea.vmem [#allocation7], %s242
        %p244 = pneg %p73
        %p245 = pneg %p70
        %p246 = pneg %p94
        %p247 = pneg %p91
        %p248 = pneg %p115
        %p249 = pneg %p112
        %p250 = pneg %p141
        %p251 = pneg %p138
        %s252 = sand.u32 %s128, 1
        %s253 = scalar_lea.sflag [#allocation5], %s252
        %s254 = sand.u32 %s128, 1
        %s255 = scalar_lea.vmem [#allocation10], %s254
        %v256 = vld [vmem:[%s216] sm:$0x1]
        %v257 = vlaneseq
        %v258 = vand.u32 %v257, 127
        %v260 = vlaneseq
        %v261 = vshrl.u32 %v260, 7
        %v262 = vsub.s32 0, %v261
        %v263 = vrot.slane %v256, %v262
        %264 = vrot.lane.b32.xlu0 %v263, 127
        %v265 = vpop.permute.xlu0 %264
        %v267 = vmul.f32 %v265, 4.1666666e-05
        %268 = vrot.lane.b32.xlu0 %v263, 126
        %v269 = vpop.permute.xlu0 %268
        %v271 = vmul.f32 %v269, 4.1666666e-05
        %v272 = vfloor.f32 %v267
        %v273 = vsub.f32 %v267, %v272
        %v274 = vfloor.f32 %v271
        %v275 = vsub.f32 %v271, %v274
        %v276 = vadd.f32 %v273, %v275
        %v277 = vmul.f32 %v276, 0.5
        %v278 = vmul.f32 %v267, 2.0
        %v279 = vmul.f32 %v271, 2.0
        %v280 = vfloor.f32 %v278
        %v281 = vsub.f32 %v278, %v280
        %v282 = vfloor.f32 %v279
        %v283 = vsub.f32 %v279, %v282
        %v284 = vadd.f32 %v281, %v283
        %v285 = vmul.f32 %v284, 0.5
        %v286 = vmul.f32 %v267, 3.0
        %v287 = vmul.f32 %v271, 3.0
        %v288 = vfloor.f32 %v286
        %v289 = vsub.f32 %v286, %v288
        %v290 = vfloor.f32 %v287
        %v291 = vsub.f32 %v287, %v290
        %v292 = vadd.f32 %v289, %v291
        %v293 = vmul.f32 %v292, 0.5
        %v294 = vmul.f32 %v267, 4.0
        %v295 = vmul.f32 %v271, 4.0
        %v296 = vfloor.f32 %v294
        %v297 = vsub.f32 %v294, %v296
        %v298 = vfloor.f32 %v295
        %v299 = vsub.f32 %v295, %v298
        %v300 = vadd.f32 %v297, %v299
        %v301 = vmul.f32 %v300, 0.5
        %v302 = vmul.f32 %v267, 5.0
        %v303 = vmul.f32 %v271, 5.0
        %v304 = vfloor.f32 %v302
        %v305 = vsub.f32 %v302, %v304
        %v306 = vfloor.f32 %v303
        %v307 = vsub.f32 %v303, %v306
        %v308 = vadd.f32 %v305, %v307
        %v309 = vmul.f32 %v308, 0.5
        %v310 = vmul.f32 %v267, 6.0
        %v311 = vmul.f32 %v271, 6.0
        %v312 = vfloor.f32 %v310
        %v313 = vsub.f32 %v310, %v312
        %v314 = vfloor.f32 %v311
        %v315 = vsub.f32 %v311, %v314
        %v316 = vadd.f32 %v313, %v315
        %v317 = vmul.f32 %v316, 0.5
        %v318 = vmul.f32 %v267, 7.0
        %v319 = vmul.f32 %v271, 7.0
        %v320 = vfloor.f32 %v318
        %v321 = vsub.f32 %v318, %v320
        %v322 = vfloor.f32 %v319
        %v323 = vsub.f32 %v319, %v322
        %v324 = vadd.f32 %v321, %v323
        %v325 = vmul.f32 %v324, 0.5
        %v326 = vmul.f32 %v267, 8.0
        %v327 = vmul.f32 %v271, 8.0
        %v328 = vfloor.f32 %v326
        %v329 = vsub.f32 %v326, %v328
        %v330 = vfloor.f32 %v327
        %v331 = vsub.f32 %v327, %v330
        %v332 = vadd.f32 %v329, %v331
        %v333 = vmul.f32 %v332, 0.5
        %v334 = vmul.f32 %v267, 9.0
        %v335 = vmul.f32 %v271, 9.0
        %v336 = vfloor.f32 %v334
        %v337 = vsub.f32 %v334, %v336
        %v338 = vfloor.f32 %v335
        %v339 = vsub.f32 %v335, %v338
        %v340 = vadd.f32 %v337, %v339
        %v341 = vmul.f32 %v340, 0.5
        %vm342 = vcmp.lt.s32.totalorder %v258, 0
        %v343 = vsub.s32 0, %v258
        %v344 = vsel %vm342, %v343, %v258
        %v345 = vshrl.u32 %v344, 2
        %v346 = vand.u32 %v344, 3
        %v347 = vsub.s32 0, %v346
        %v348 = vsel %vm342, %v347, %v346
        %vm349 = vcmp.ne.s32.totalorder %v348, 0
        %vm350 = vcmp.lt.s32.totalorder %v348, 0
        %vm351 = vmand %vm350, %vm349
        %v352 = vadd.s32 %v348, 4
        %v353 = vsel %vm351, %v352, %v348
        %vm354 = vcmp.eq.s32.totalorder %v353, 0
        %v355 = vsel %vm354, 1, 0
        %vm356 = vcmp.eq.s32.totalorder %v355, 1
        %v357 = vsel %vm356, %v277, 0.0
        %v358 = vsel %vm356, %v285, 0.0
        %v359 = vsel %vm356, %v293, 0.0
        %v360 = vsel %vm356, %v301, 0.0
        %v361 = vsel %vm356, %v309, 0.0
        %v362 = vsel %vm356, %v317, 0.0
        %v363 = vsel %vm356, %v325, 0.0
        %v364 = vsel %vm356, %v333, 0.0
        %v365 = vsel %vm356, %v341, 0.0
        %vm366 = vcmp.ge.s32.totalorder %v258, 1
        %376 = vrot.lane.b32.xlu0 %v357, 1
        %v377 = vpop.permute.xlu0 %376
        %378 = vrot.lane.b32.xlu0 %v358, 1
        %v379 = vpop.permute.xlu0 %378
        %380 = vrot.lane.b32.xlu0 %v359, 1
        %v381 = vpop.permute.xlu0 %380
        %382 = vrot.lane.b32.xlu0 %v360, 1
        %v383 = vpop.permute.xlu0 %382
        %384 = vrot.lane.b32.xlu0 %v361, 1
        %v385 = vpop.permute.xlu0 %384
        %386 = vrot.lane.b32.xlu0 %v362, 1
        %v387 = vpop.permute.xlu0 %386
        %388 = vrot.lane.b32.xlu0 %v363, 1
        %v389 = vpop.permute.xlu0 %388
        %390 = vrot.lane.b32.xlu0 %v364, 1
        %v391 = vpop.permute.xlu0 %390
        %392 = vrot.lane.b32.xlu0 %v365, 1
        %v393 = vpop.permute.xlu0 %392
        %v403 = vsel %vm366, 1, 0
        %vm404 = vcmp.eq.s32.totalorder %v403, 1
        %v405 = vsel %vm404, %v377, 0.0
        %v406 = vsel %vm404, %v379, 0.0
        %v407 = vsel %vm404, %v381, 0.0
        %v408 = vsel %vm404, %v383, 0.0
        %v409 = vsel %vm404, %v385, 0.0
        %v410 = vsel %vm404, %v387, 0.0
        %v411 = vsel %vm404, %v389, 0.0
        %v412 = vsel %vm404, %v391, 0.0
        %v413 = vsel %vm404, %v393, 0.0
        %v414 = vadd.f32 %v357, %v405
        %v415 = vadd.f32 %v358, %v406
        %v416 = vadd.f32 %v359, %v407
        %v417 = vadd.f32 %v360, %v408
        %v418 = vadd.f32 %v361, %v409
        %v419 = vadd.f32 %v362, %v410
        %v420 = vadd.f32 %v363, %v411
        %v421 = vadd.f32 %v364, %v412
        %v422 = vadd.f32 %v365, %v413
        %vm423 = vcmp.ge.s32.totalorder %v258, 2
        %433 = vrot.lane.b32.xlu0 %v414, 2
        %v434 = vpop.permute.xlu0 %433
        %435 = vrot.lane.b32.xlu0 %v415, 2
        %v436 = vpop.permute.xlu0 %435
        %437 = vrot.lane.b32.xlu0 %v416, 2
        %v438 = vpop.permute.xlu0 %437
        %439 = vrot.lane.b32.xlu0 %v417, 2
        %v440 = vpop.permute.xlu0 %439
        %441 = vrot.lane.b32.xlu0 %v418, 2
        %v442 = vpop.permute.xlu0 %441
        %443 = vrot.lane.b32.xlu0 %v419, 2
        %v444 = vpop.permute.xlu0 %443
        %445 = vrot.lane.b32.xlu0 %v420, 2
        %v446 = vpop.permute.xlu0 %445
        %447 = vrot.lane.b32.xlu0 %v421, 2
        %v448 = vpop.permute.xlu0 %447
        %449 = vrot.lane.b32.xlu0 %v422, 2
        %v450 = vpop.permute.xlu0 %449
        %v460 = vsel %vm423, 1, 0
        %vm461 = vcmp.eq.s32.totalorder %v460, 1
        %v462 = vsel %vm461, %v434, 0.0
        %v463 = vsel %vm461, %v436, 0.0
        %v464 = vsel %vm461, %v438, 0.0
        %v465 = vsel %vm461, %v440, 0.0
        %v466 = vsel %vm461, %v442, 0.0
        %v467 = vsel %vm461, %v444, 0.0
        %v468 = vsel %vm461, %v446, 0.0
        %v469 = vsel %vm461, %v448, 0.0
        %v470 = vsel %vm461, %v450, 0.0
        %v471 = vadd.f32 %v414, %v462
        %v472 = vadd.f32 %v415, %v463
        %v473 = vadd.f32 %v416, %v464
        %v474 = vadd.f32 %v417, %v465
        %v475 = vadd.f32 %v418, %v466
        %v476 = vadd.f32 %v419, %v467
        %v477 = vadd.f32 %v420, %v468
        %v478 = vadd.f32 %v421, %v469
        %v479 = vadd.f32 %v422, %v470
        %vm480 = vcmp.ge.s32.totalorder %v258, 4
        %490 = vrot.lane.b32.xlu0 %v471, 4
        %v491 = vpop.permute.xlu0 %490
        %492 = vrot.lane.b32.xlu0 %v472, 4
        %v493 = vpop.permute.xlu0 %492
        %494 = vrot.lane.b32.xlu0 %v473, 4
        %v495 = vpop.permute.xlu0 %494
        %496 = vrot.lane.b32.xlu0 %v474, 4
        %v497 = vpop.permute.xlu0 %496
        %498 = vrot.lane.b32.xlu0 %v475, 4
        %v499 = vpop.permute.xlu0 %498
        %500 = vrot.lane.b32.xlu0 %v476, 4
        %v501 = vpop.permute.xlu0 %500
        %502 = vrot.lane.b32.xlu0 %v477, 4
        %v503 = vpop.permute.xlu0 %502
        %504 = vrot.lane.b32.xlu0 %v478, 4
        %v505 = vpop.permute.xlu0 %504
        %506 = vrot.lane.b32.xlu0 %v479, 4
        %v507 = vpop.permute.xlu0 %506
        %v517 = vsel %vm480, 1, 0
        %vm518 = vcmp.eq.s32.totalorder %v517, 1
        %v519 = vsel %vm518, %v491, 0.0
        %v520 = vsel %vm518, %v493, 0.0
        %v521 = vsel %vm518, %v495, 0.0
        %v522 = vsel %vm518, %v497, 0.0
        %v523 = vsel %vm518, %v499, 0.0
        %v524 = vsel %vm518, %v501, 0.0
        %v525 = vsel %vm518, %v503, 0.0
        %v526 = vsel %vm518, %v505, 0.0
        %v527 = vsel %vm518, %v507, 0.0
        %v528 = vadd.f32 %v471, %v519
        %v529 = vadd.f32 %v472, %v520
        %v530 = vadd.f32 %v473, %v521
        %v531 = vadd.f32 %v474, %v522
        %v532 = vadd.f32 %v475, %v523
        %v533 = vadd.f32 %v476, %v524
        %v534 = vadd.f32 %v477, %v525
        %v535 = vadd.f32 %v478, %v526
        %v536 = vadd.f32 %v479, %v527
        %vm537 = vcmp.ge.s32.totalorder %v258, 8
        %547 = vrot.lane.b32.xlu0 %v528, 8
        %v548 = vpop.permute.xlu0 %547
        %549 = vrot.lane.b32.xlu0 %v529, 8
        %v550 = vpop.permute.xlu0 %549
        %551 = vrot.lane.b32.xlu0 %v530, 8
        %v552 = vpop.permute.xlu0 %551
        %553 = vrot.lane.b32.xlu0 %v531, 8
        %v554 = vpop.permute.xlu0 %553
        %555 = vrot.lane.b32.xlu0 %v532, 8
        %v556 = vpop.permute.xlu0 %555
        %557 = vrot.lane.b32.xlu0 %v533, 8
        %v558 = vpop.permute.xlu0 %557
        %559 = vrot.lane.b32.xlu0 %v534, 8
        %v560 = vpop.permute.xlu0 %559
        %561 = vrot.lane.b32.xlu0 %v535, 8
        %v562 = vpop.permute.xlu0 %561
        %563 = vrot.lane.b32.xlu0 %v536, 8
        %v564 = vpop.permute.xlu0 %563
        %v574 = vsel %vm537, 1, 0
        %vm575 = vcmp.eq.s32.totalorder %v574, 1
        %v576 = vsel %vm575, %v548, 0.0
        %v577 = vsel %vm575, %v550, 0.0
        %v578 = vsel %vm575, %v552, 0.0
        %v579 = vsel %vm575, %v554, 0.0
        %v580 = vsel %vm575, %v556, 0.0
        %v581 = vsel %vm575, %v558, 0.0
        %v582 = vsel %vm575, %v560, 0.0
        %v583 = vsel %vm575, %v562, 0.0
        %v584 = vsel %vm575, %v564, 0.0
        %v585 = vadd.f32 %v528, %v576
        %v586 = vadd.f32 %v529, %v577
        %v587 = vadd.f32 %v530, %v578
        %v588 = vadd.f32 %v531, %v579
        %v589 = vadd.f32 %v532, %v580
        %v590 = vadd.f32 %v533, %v581
        %v591 = vadd.f32 %v534, %v582
        %v592 = vadd.f32 %v535, %v583
        %v593 = vadd.f32 %v536, %v584
        %vm594 = vcmp.ge.s32.totalorder %v258, 16
        %604 = vrot.lane.b32.xlu0 %v585, 16
        %v605 = vpop.permute.xlu0 %604
        %606 = vrot.lane.b32.xlu0 %v586, 16
        %v607 = vpop.permute.xlu0 %606
        %608 = vrot.lane.b32.xlu0 %v587, 16
        %v609 = vpop.permute.xlu0 %608
        %610 = vrot.lane.b32.xlu0 %v588, 16
        %v611 = vpop.permute.xlu0 %610
        %612 = vrot.lane.b32.xlu0 %v589, 16
        %v613 = vpop.permute.xlu0 %612
        %614 = vrot.lane.b32.xlu0 %v590, 16
        %v615 = vpop.permute.xlu0 %614
        %616 = vrot.lane.b32.xlu0 %v591, 16
        %v617 = vpop.permute.xlu0 %616
        %618 = vrot.lane.b32.xlu0 %v592, 16
        %v619 = vpop.permute.xlu0 %618
        %620 = vrot.lane.b32.xlu0 %v593, 16
        %v621 = vpop.permute.xlu0 %620
        %v631 = vsel %vm594, 1, 0
        %vm632 = vcmp.eq.s32.totalorder %v631, 1
        %v633 = vsel %vm632, %v605, 0.0
        %v634 = vsel %vm632, %v607, 0.0
        %v635 = vsel %vm632, %v609, 0.0
        %v636 = vsel %vm632, %v611, 0.0
        %v637 = vsel %vm632, %v613, 0.0
        %v638 = vsel %vm632, %v615, 0.0
        %v639 = vsel %vm632, %v617, 0.0
        %v640 = vsel %vm632, %v619, 0.0
        %v641 = vsel %vm632, %v621, 0.0
        %v642 = vadd.f32 %v585, %v633
        %v643 = vadd.f32 %v586, %v634
        %v644 = vadd.f32 %v587, %v635
        %v645 = vadd.f32 %v588, %v636
        %v646 = vadd.f32 %v589, %v637
        %v647 = vadd.f32 %v590, %v638
        %v648 = vadd.f32 %v591, %v639
        %v649 = vadd.f32 %v592, %v640
        %v650 = vadd.f32 %v593, %v641
        %vm651 = vcmp.ge.s32.totalorder %v258, 32
        %661 = vrot.lane.b32.xlu0 %v642, 32
        %v662 = vpop.permute.xlu0 %661
        %663 = vrot.lane.b32.xlu0 %v643, 32
        %v664 = vpop.permute.xlu0 %663
        %665 = vrot.lane.b32.xlu0 %v644, 32
        %v666 = vpop.permute.xlu0 %665
        %667 = vrot.lane.b32.xlu0 %v645, 32
        %v668 = vpop.permute.xlu0 %667
        %669 = vrot.lane.b32.xlu0 %v646, 32
        %v670 = vpop.permute.xlu0 %669
        %671 = vrot.lane.b32.xlu0 %v647, 32
        %v672 = vpop.permute.xlu0 %671
        %673 = vrot.lane.b32.xlu0 %v648, 32
        %v674 = vpop.permute.xlu0 %673
        %675 = vrot.lane.b32.xlu0 %v649, 32
        %v676 = vpop.permute.xlu0 %675
        %677 = vrot.lane.b32.xlu0 %v650, 32
        %v678 = vpop.permute.xlu0 %677
        %v688 = vsel %vm651, 1, 0
        %vm689 = vcmp.eq.s32.totalorder %v688, 1
        %v690 = vsel %vm689, %v662, 0.0
        %v691 = vsel %vm689, %v664, 0.0
        %v692 = vsel %vm689, %v666, 0.0
        %v693 = vsel %vm689, %v668, 0.0
        %v694 = vsel %vm689, %v670, 0.0
        %v695 = vsel %vm689, %v672, 0.0
        %v696 = vsel %vm689, %v674, 0.0
        %v697 = vsel %vm689, %v676, 0.0
        %v698 = vsel %vm689, %v678, 0.0
        %v699 = vadd.f32 %v642, %v690
        %v700 = vadd.f32 %v643, %v691
        %v701 = vadd.f32 %v644, %v692
        %v702 = vadd.f32 %v645, %v693
        %v703 = vadd.f32 %v646, %v694
        %v704 = vadd.f32 %v647, %v695
        %v705 = vadd.f32 %v648, %v696
        %v706 = vadd.f32 %v649, %v697
        %v707 = vadd.f32 %v650, %v698
        %vm708 = vcmp.ge.s32.totalorder %v258, 64
        %718 = vrot.lane.b32.xlu0 %v699, 64
        %v719 = vpop.permute.xlu0 %718
        %720 = vrot.lane.b32.xlu0 %v700, 64
        %v721 = vpop.permute.xlu0 %720
        %722 = vrot.lane.b32.xlu0 %v701, 64
        %v723 = vpop.permute.xlu0 %722
        %724 = vrot.lane.b32.xlu0 %v702, 64
        %v725 = vpop.permute.xlu0 %724
        %726 = vrot.lane.b32.xlu0 %v703, 64
        %v727 = vpop.permute.xlu0 %726
        %728 = vrot.lane.b32.xlu0 %v704, 64
        %v729 = vpop.permute.xlu0 %728
        %730 = vrot.lane.b32.xlu0 %v705, 64
        %v731 = vpop.permute.xlu0 %730
        %732 = vrot.lane.b32.xlu0 %v706, 64
        %v733 = vpop.permute.xlu0 %732
        %734 = vrot.lane.b32.xlu0 %v707, 64
        %v735 = vpop.permute.xlu0 %734
        %v745 = vsel %vm708, 1, 0
        %vm746 = vcmp.eq.s32.totalorder %v745, 1
        %v747 = vsel %vm746, %v719, 0.0
        %v748 = vsel %vm746, %v721, 0.0
        %v749 = vsel %vm746, %v723, 0.0
        %v750 = vsel %vm746, %v725, 0.0
        %v751 = vsel %vm746, %v727, 0.0
        %v752 = vsel %vm746, %v729, 0.0
        %v753 = vsel %vm746, %v731, 0.0
        %v754 = vsel %vm746, %v733, 0.0
        %v755 = vsel %vm746, %v735, 0.0
        %v756 = vadd.f32 %v699, %v747
        %v757 = vadd.f32 %v700, %v748
        %v758 = vadd.f32 %v701, %v749
        %v759 = vadd.f32 %v702, %v750
        %v760 = vadd.f32 %v703, %v751
        %v761 = vadd.f32 %v704, %v752
        %v762 = vadd.f32 %v705, %v753
        %v763 = vadd.f32 %v706, %v754
        %v764 = vadd.f32 %v707, %v755
        %774 = vrot.lane.b32.xlu0 %v756, 4
        %v775 = vpop.permute.xlu0 %774
        %776 = vrot.lane.b32.xlu0 %v757, 4
        %v777 = vpop.permute.xlu0 %776
        %778 = vrot.lane.b32.xlu0 %v758, 4
        %v779 = vpop.permute.xlu0 %778
        %780 = vrot.lane.b32.xlu0 %v759, 4
        %v781 = vpop.permute.xlu0 %780
        %782 = vrot.lane.b32.xlu0 %v760, 4
        %v783 = vpop.permute.xlu0 %782
        %784 = vrot.lane.b32.xlu0 %v761, 4
        %v785 = vpop.permute.xlu0 %784
        %786 = vrot.lane.b32.xlu0 %v762, 4
        %v787 = vpop.permute.xlu0 %786
        %788 = vrot.lane.b32.xlu0 %v763, 4
        %v789 = vpop.permute.xlu0 %788
        %790 = vrot.lane.b32.xlu0 %v764, 4
        %v791 = vpop.permute.xlu0 %790
        %v801 = vsel %vm518, %v775, %v756
        %v802 = vsel %vm518, %v777, %v757
        %v803 = vsel %vm518, %v779, %v758
        %v804 = vsel %vm518, %v781, %v759
        %v805 = vsel %vm518, %v783, %v760
        %v806 = vsel %vm518, %v785, %v761
        %v807 = vsel %vm518, %v787, %v762
        %v808 = vsel %vm518, %v789, %v763
        %v809 = vsel %vm518, %v791, %v764
        %vm810 = vcmp.lt.s32.totalorder %v258, 124
        %811 = vrot.lane.b32.xlu0 %v756, 124
        %v812 = vpop.permute.xlu0 %811
        %813 = vrot.lane.b32.xlu0 %v757, 124
        %v814 = vpop.permute.xlu0 %813
        %815 = vrot.lane.b32.xlu0 %v758, 124
        %v816 = vpop.permute.xlu0 %815
        %817 = vrot.lane.b32.xlu0 %v759, 124
        %v818 = vpop.permute.xlu0 %817
        %819 = vrot.lane.b32.xlu0 %v760, 124
        %v820 = vpop.permute.xlu0 %819
        %821 = vrot.lane.b32.xlu0 %v761, 124
        %v822 = vpop.permute.xlu0 %821
        %823 = vrot.lane.b32.xlu0 %v762, 124
        %v824 = vpop.permute.xlu0 %823
        %825 = vrot.lane.b32.xlu0 %v763, 124
        %v826 = vpop.permute.xlu0 %825
        %827 = vrot.lane.b32.xlu0 %v764, 124
        %v828 = vpop.permute.xlu0 %827
        %v838 = vsel %vm810, 1, 0
        %vm839 = vcmp.eq.s32.totalorder %v838, 1
        %v840 = vsel %vm839, %v812, %v756
        %v841 = vsel %vm839, %v814, %v757
        %v842 = vsel %vm839, %v816, %v758
        %v843 = vsel %vm839, %v818, %v759
        %v844 = vsel %vm839, %v820, %v760
        %v845 = vsel %vm839, %v822, %v761
        %v846 = vsel %vm839, %v824, %v762
        %v847 = vsel %vm839, %v826, %v763
        %v848 = vsel %vm839, %v828, %v764
        %vm849 = vcmp.eq.s32.totalorder %v353, 1
        %v850 = vsel %vm849, 0.125, 0.0
        %v851 = vsel %vm354, 0.375, %v850
        %vm852 = vcmp.eq.s32.totalorder %v353, 2
        %vm853 = vcmp.eq.s32.totalorder %v353, 3
        %v854 = vsel %vm853, 0.375, 0.0
        %v855 = vsel %vm852, 0.125, %v854
        %v856 = vmul.f32 %v851, %v801
        %v857 = vmul.f32 %v851, %v802
        %v858 = vmul.f32 %v851, %v803
        %v859 = vmul.f32 %v851, %v804
        %v860 = vmul.f32 %v851, %v805
        %v861 = vmul.f32 %v851, %v806
        %v862 = vmul.f32 %v851, %v807
        %v863 = vmul.f32 %v851, %v808
        %v864 = vmul.f32 %v851, %v809
        %v865 = vsub.f32 1.0, %v851
        %v866 = vsub.f32 %v865, %v855
        %v867 = vmul.f32 %v866, %v756
        %v868 = vmul.f32 %v866, %v757
        %v869 = vmul.f32 %v866, %v758
        %v870 = vmul.f32 %v866, %v759
        %v871 = vmul.f32 %v866, %v760
        %v872 = vmul.f32 %v866, %v761
        %v873 = vmul.f32 %v866, %v762
        %v874 = vmul.f32 %v866, %v763
        %v875 = vmul.f32 %v866, %v764
        %v876 = vadd.f32 %v856, %v867
        %v877 = vadd.f32 %v857, %v868
        %v878 = vadd.f32 %v858, %v869
        %v879 = vadd.f32 %v859, %v870
        %v880 = vadd.f32 %v860, %v871
        %v881 = vadd.f32 %v861, %v872
        %v882 = vadd.f32 %v862, %v873
        %v883 = vadd.f32 %v863, %v874
        %v884 = vadd.f32 %v864, %v875
        %v885 = vmul.f32 %v855, %v840
        %v886 = vmul.f32 %v855, %v841
        %v887 = vmul.f32 %v855, %v842
        %v888 = vmul.f32 %v855, %v843
        %v889 = vmul.f32 %v855, %v844
        %v890 = vmul.f32 %v855, %v845
        %v891 = vmul.f32 %v855, %v846
        %v892 = vmul.f32 %v855, %v847
        %v893 = vmul.f32 %v855, %v848
        %v894 = vadd.f32 %v876, %v885
        %v895 = vadd.f32 %v877, %v886
        %v896 = vadd.f32 %v878, %v887
        %v897 = vadd.f32 %v879, %v888
        %v898 = vadd.f32 %v880, %v889
        %v899 = vadd.f32 %v881, %v890
        %v900 = vadd.f32 %v882, %v891
        %v901 = vadd.f32 %v883, %v892
        %v902 = vadd.f32 %v884, %v893
        %v903 = vmul.f32 %v894, 25.132742
        %v904 = vmul.f32 %v895, 25.132742
        %v905 = vmul.f32 %v896, 25.132742
        %v906 = vmul.f32 %v897, 25.132742
        %v907 = vmul.f32 %v898, 25.132742
        %v908 = vmul.f32 %v899, 25.132742
        %v909 = vmul.f32 %v900, 25.132742
        %v910 = vmul.f32 %v901, 25.132742
        %v911 = vmul.f32 %v902, 25.132742
        %v912 = vand.u32 2147483647, %v903
        %vm913 = vcmp.le.f32.partialorder %v912, 0.7853982
        %vm914 = vcmp.lt.s32.totalorder %v903, 0
        %v915 = vand.u32 %v903, 2139095040
        %v916 = vshrl.u32 %v915, 23
        %v917 = vsub.s32 %v916, 127
        %v918 = vand.u32 2147483647, %v903
        %v919 = vand.u32 %v918, 8388607
        %v920 = vor.u32 %v919, 8388608
        %v921 = vsub.s32 0, %v920
        %v922 = vadd.s32 %v917, 1
        %vm923 = vcmp.gt.s32.totalorder %v922, 0
        %v924 = vsel %vm923, %v922, 0
        %v925 = vshrl.u32 %v924, 5
        %v926 = vand.u32 %v924, 31
        %v927 = vsub.s32 32, %v926
        %v928 = vshrl.u32 683565275, %v927
        %v929 = vshll.u32 683565275, %v926
        %v930 = vshrl.u32 2475754826, %v927
        %v931 = vor.u32 %v929, %v930
        %v932 = vshll.u32 2475754826, %v926
        %v933 = vshrl.u32 2131351028, %v927
        %v934 = vor.u32 %v932, %v933
        %v935 = vshll.u32 2131351028, %v926
        %v936 = vshrl.u32 2102212464, %v927
        %v937 = vor.u32 %v935, %v936
        %v938 = vshll.u32 2102212464, %v926
        %v939 = vshrl.u32 920167782, %v927
        %v940 = vor.u32 %v938, %v939
        %v941 = vshll.u32 920167782, %v926
        %v942 = vshrl.u32 1326507024, %v927
        %v943 = vor.u32 %v941, %v942
        %vm944 = vcmp.lt.s32.totalorder %v925, 1
        %vm945 = vcmp.lt.s32.totalorder %v925, 2
        %vm946 = vcmp.lt.s32.totalorder %v925, 3
        %vm947 = vcmp.lt.s32.totalorder %v925, 4
        %v948 = vsel %vm944, %v928, %v931
        %v949 = vsel %vm947, %v937, 2102212464
        %v950 = vsel %vm946, %v934, %v949
        %v951 = vsel %vm945, %v948, %v950
        %v952 = vsel %vm944, %v931, %v934
        %v953 = vsel %vm947, %v940, 920167782
        %v954 = vsel %vm946, %v937, %v953
        %v955 = vsel %vm945, %v952, %v954
        %v956 = vsel %vm944, %v934, %v937
        %v957 = vsel %vm947, %v943, 1326507024
        %v958 = vsel %vm946, %v940, %v957
        %v959 = vsel %vm945, %v956, %v958
        %v960 = vshll.u32 %v920, 8
        %v961 = vmul.u32.u64.compose %v960, %v959
        %v962 = vextract.low.u32 %v961
        %v963 = vextract.high.u32 %v961
        %v964 = vmul.u32.u64.compose %v960, %v955
        %v965 = vextract.low.u32 %v964
        %v966 = vextract.high.u32 %v964
        %v967 = vmul.u32 %v960, %v951
        %v968 = vadd.s32 %v963, %v965
        %vm969 = vc.u32 %v963, %v965
        %v970 = vadd.s32 %v966, 1
        %v971 = vsel %vm969, %v970, %v966
        %v972 = vadd.s32 %v967, %v971
        %v973 = vadd.s32 %v972, 536870912
        %v974 = vshrl.u32 %v973, 30
        %v975 = vshll.u32 %v974, 30
        %v976 = vsub.s32 %v972, %v975
        %vm977 = vcmp.lt.s32.totalorder %v976, 0
        %v978 = vsub.s32 0, %v976
        %v979 = vsel %vm977, %v978, %v976
        %v980 = vclz %v979
        %v981 = vsub.s32 %v980, 2
        %vm982 = vcmp.gt.s32.totalorder 0, %v981
        %v983 = vsel %vm982, 0, %v981
        %v984 = vsub.s32 32, %v983
        %v985 = vshll.u32 %v976, %v983
        %v986 = vshrl.u32 %v968, %v984
        %v987 = vor.u32 %v985, %v986
        %v988 = vsub.s32 4294967266, %v983
        %v989 = vadd.s32 %v988, 127
        %v990 = vshll.u32 %v989, 23
        %v991 = vor.u32 4788187, %v990
        %v992 = vand.u32 2147483647, %v991
        %v994 = vcvt.s32.f32 %v987
        %v995 = vmul.f32 %v994, %v992
        %v996 = vxor.u32 %v995, 2147483648
        %v997 = vsel %vm914, %v996, %v995
        %v998 = vsub.s32 4, %v974
        %v999 = vsel %vm914, %v998, %v974
        %v1000 = vsel %vm913, %v903, %v997
        %v1001 = vsel %vm913, 0, %v999
        %v1002 = vcosq.f32.pop %v1000
        %v1003 = vsinq.f32.pop %v1000
        %vm1004 = vweird.f32 %v903
        %v1005 = vadd.s32 %v1001, 3
        %v1006 = vand.u32 %v1005, 3
        %vm1007 = vcmp.lt.s32.totalorder %v1006, 2
        %vm1008 = vcmp.eq.s32.totalorder %v1006, 0
        %v1009 = vxor.u32 %v1003, 2147483648
        %v1010 = vsel %vm1008, %v1002, %v1009
        %vm1011 = vcmp.eq.s32.totalorder %v1006, 2
        %v1012 = vxor.u32 %v1002, 2147483648
        %v1013 = vsel %vm1011, %v1012, %v1003
        %v1014 = vsel %vm1007, %v1010, %v1013
        %v1015 = vsel %vm1004, nan, %v1014
        %v1016 = vand.u32 2147483647, %v904
        %vm1017 = vcmp.le.f32.partialorder %v1016, 0.7853982
        %vm1018 = vcmp.lt.s32.totalorder %v904, 0
        %v1019 = vand.u32 %v904, 2139095040
        %v1020 = vshrl.u32 %v1019, 23
        %v1021 = vsub.s32 %v1020, 127
        %v1022 = vand.u32 2147483647, %v904
        %v1023 = vand.u32 %v1022, 8388607
        %v1024 = vor.u32 %v1023, 8388608
        %v1025 = vsub.s32 0, %v1024
        %v1026 = vadd.s32 %v1021, 1
        %vm1027 = vcmp.gt.s32.totalorder %v1026, 0
        %v1028 = vsel %vm1027, %v1026, 0
        %v1029 = vshrl.u32 %v1028, 5
        %v1030 = vand.u32 %v1028, 31
        %v1031 = vsub.s32 32, %v1030
        %v1032 = vshrl.u32 683565275, %v1031
        %v1033 = vshll.u32 683565275, %v1030
        %v1034 = vshrl.u32 2475754826, %v1031
        %v1035 = vor.u32 %v1033, %v1034
        %v1036 = vshll.u32 2475754826, %v1030
        %v1037 = vshrl.u32 2131351028, %v1031
        %v1038 = vor.u32 %v1036, %v1037
        %v1039 = vshll.u32 2131351028, %v1030
        %v1040 = vshrl.u32 2102212464, %v1031
        %v1041 = vor.u32 %v1039, %v1040
        %v1042 = vshll.u32 2102212464, %v1030
        %v1043 = vshrl.u32 920167782, %v1031
        %v1044 = vor.u32 %v1042, %v1043
        %v1045 = vshll.u32 920167782, %v1030
        %v1046 = vshrl.u32 1326507024, %v1031
        %v1047 = vor.u32 %v1045, %v1046
        %vm1048 = vcmp.lt.s32.totalorder %v1029, 1
        %vm1049 = vcmp.lt.s32.totalorder %v1029, 2
        %vm1050 = vcmp.lt.s32.totalorder %v1029, 3
        %vm1051 = vcmp.lt.s32.totalorder %v1029, 4
        %v1052 = vsel %vm1048, %v1032, %v1035
        %v1053 = vsel %vm1051, %v1041, 2102212464
        %v1054 = vsel %vm1050, %v1038, %v1053
        %v1055 = vsel %vm1049, %v1052, %v1054
        %v1056 = vsel %vm1048, %v1035, %v1038
        %v1057 = vsel %vm1051, %v1044, 920167782
        %v1058 = vsel %vm1050, %v1041, %v1057
        %v1059 = vsel %vm1049, %v1056, %v1058
        %v1060 = vsel %vm1048, %v1038, %v1041
        %v1061 = vsel %vm1051, %v1047, 1326507024
        %v1062 = vsel %vm1050, %v1044, %v1061
        %v1063 = vsel %vm1049, %v1060, %v1062
        %v1064 = vshll.u32 %v1024, 8
        %v1065 = vmul.u32.u64.compose %v1064, %v1063
        %v1066 = vextract.low.u32 %v1065
        %v1067 = vextract.high.u32 %v1065
        %v1068 = vmul.u32.u64.compose %v1064, %v1059
        %v1069 = vextract.low.u32 %v1068
        %v1070 = vextract.high.u32 %v1068
        %v1071 = vmul.u32 %v1064, %v1055
        %v1072 = vadd.s32 %v1067, %v1069
        %vm1073 = vc.u32 %v1067, %v1069
        %v1074 = vadd.s32 %v1070, 1
        %v1075 = vsel %vm1073, %v1074, %v1070
        %v1076 = vadd.s32 %v1071, %v1075
        %v1077 = vadd.s32 %v1076, 536870912
        %v1078 = vshrl.u32 %v1077, 30
        %v1079 = vshll.u32 %v1078, 30
        %v1080 = vsub.s32 %v1076, %v1079
        %vm1081 = vcmp.lt.s32.totalorder %v1080, 0
        %v1082 = vsub.s32 0, %v1080
        %v1083 = vsel %vm1081, %v1082, %v1080
        %v1084 = vclz %v1083
        %v1085 = vsub.s32 %v1084, 2
        %vm1086 = vcmp.gt.s32.totalorder 0, %v1085
        %v1087 = vsel %vm1086, 0, %v1085
        %v1088 = vsub.s32 32, %v1087
        %v1089 = vshll.u32 %v1080, %v1087
        %v1090 = vshrl.u32 %v1072, %v1088
        %v1091 = vor.u32 %v1089, %v1090
        %v1092 = vsub.s32 4294967266, %v1087
        %v1093 = vadd.s32 %v1092, 127
        %v1094 = vshll.u32 %v1093, 23
        %v1095 = vor.u32 4788187, %v1094
        %v1096 = vand.u32 2147483647, %v1095
        %v1098 = vcvt.s32.f32 %v1091
        %v1099 = vmul.f32 %v1098, %v1096
        %v1100 = vxor.u32 %v1099, 2147483648
        %v1101 = vsel %vm1018, %v1100, %v1099
        %v1102 = vsub.s32 4, %v1078
        %v1103 = vsel %vm1018, %v1102, %v1078
        %v1104 = vsel %vm1017, %v904, %v1101
        %v1105 = vsel %vm1017, 0, %v1103
        %v1106 = vcosq.f32.pop %v1104
        %v1107 = vsinq.f32.pop %v1104
        %vm1108 = vweird.f32 %v904
        %v1109 = vadd.s32 %v1105, 3
        %v1110 = vand.u32 %v1109, 3
        %vm1111 = vcmp.lt.s32.totalorder %v1110, 2
        %vm1112 = vcmp.eq.s32.totalorder %v1110, 0
        %v1113 = vxor.u32 %v1107, 2147483648
        %v1114 = vsel %vm1112, %v1106, %v1113
        %vm1115 = vcmp.eq.s32.totalorder %v1110, 2
        %v1116 = vxor.u32 %v1106, 2147483648
        %v1117 = vsel %vm1115, %v1116, %v1107
        %v1118 = vsel %vm1111, %v1114, %v1117
        %v1119 = vsel %vm1108, nan, %v1118
        %v1120 = vand.u32 2147483647, %v905
        %vm1121 = vcmp.le.f32.partialorder %v1120, 0.7853982
        %vm1122 = vcmp.lt.s32.totalorder %v905, 0
        %v1123 = vand.u32 %v905, 2139095040
        %v1124 = vshrl.u32 %v1123, 23
        %v1125 = vsub.s32 %v1124, 127
        %v1126 = vand.u32 2147483647, %v905
        %v1127 = vand.u32 %v1126, 8388607
        %v1128 = vor.u32 %v1127, 8388608
        %v1129 = vsub.s32 0, %v1128
        %v1130 = vadd.s32 %v1125, 1
        %vm1131 = vcmp.gt.s32.totalorder %v1130, 0
        %v1132 = vsel %vm1131, %v1130, 0
        %v1133 = vshrl.u32 %v1132, 5
        %v1134 = vand.u32 %v1132, 31
        %v1135 = vsub.s32 32, %v1134
        %v1136 = vshrl.u32 683565275, %v1135
        %v1137 = vshll.u32 683565275, %v1134
        %v1138 = vshrl.u32 2475754826, %v1135
        %v1139 = vor.u32 %v1137, %v1138
        %v1140 = vshll.u32 2475754826, %v1134
        %v1141 = vshrl.u32 2131351028, %v1135
        %v1142 = vor.u32 %v1140, %v1141
        %v1143 = vshll.u32 2131351028, %v1134
        %v1144 = vshrl.u32 2102212464, %v1135
        %v1145 = vor.u32 %v1143, %v1144
        %v1146 = vshll.u32 2102212464, %v1134
        %v1147 = vshrl.u32 920167782, %v1135
        %v1148 = vor.u32 %v1146, %v1147
        %v1149 = vshll.u32 920167782, %v1134
        %v1150 = vshrl.u32 1326507024, %v1135
        %v1151 = vor.u32 %v1149, %v1150
        %vm1152 = vcmp.lt.s32.totalorder %v1133, 1
        %vm1153 = vcmp.lt.s32.totalorder %v1133, 2
        %vm1154 = vcmp.lt.s32.totalorder %v1133, 3
        %vm1155 = vcmp.lt.s32.totalorder %v1133, 4
        %v1156 = vsel %vm1152, %v1136, %v1139
        %v1157 = vsel %vm1155, %v1145, 2102212464
        %v1158 = vsel %vm1154, %v1142, %v1157
        %v1159 = vsel %vm1153, %v1156, %v1158
        %v1160 = vsel %vm1152, %v1139, %v1142
        %v1161 = vsel %vm1155, %v1148, 920167782
        %v1162 = vsel %vm1154, %v1145, %v1161
        %v1163 = vsel %vm1153, %v1160, %v1162
        %v1164 = vsel %vm1152, %v1142, %v1145
        %v1165 = vsel %vm1155, %v1151, 1326507024
        %v1166 = vsel %vm1154, %v1148, %v1165
        %v1167 = vsel %vm1153, %v1164, %v1166
        %v1168 = vshll.u32 %v1128, 8
        %v1169 = vmul.u32.u64.compose %v1168, %v1167
        %v1170 = vextract.low.u32 %v1169
        %v1171 = vextract.high.u32 %v1169
        %v1172 = vmul.u32.u64.compose %v1168, %v1163
        %v1173 = vextract.low.u32 %v1172
        %v1174 = vextract.high.u32 %v1172
        %v1175 = vmul.u32 %v1168, %v1159
        %v1176 = vadd.s32 %v1171, %v1173
        %vm1177 = vc.u32 %v1171, %v1173
        %v1178 = vadd.s32 %v1174, 1
        %v1179 = vsel %vm1177, %v1178, %v1174
        %v1180 = vadd.s32 %v1175, %v1179
        %v1181 = vadd.s32 %v1180, 536870912
        %v1182 = vshrl.u32 %v1181, 30
        %v1183 = vshll.u32 %v1182, 30
        %v1184 = vsub.s32 %v1180, %v1183
        %vm1185 = vcmp.lt.s32.totalorder %v1184, 0
        %v1186 = vsub.s32 0, %v1184
        %v1187 = vsel %vm1185, %v1186, %v1184
        %v1188 = vclz %v1187
        %v1189 = vsub.s32 %v1188, 2
        %vm1190 = vcmp.gt.s32.totalorder 0, %v1189
        %v1191 = vsel %vm1190, 0, %v1189
        %v1192 = vsub.s32 32, %v1191
        %v1193 = vshll.u32 %v1184, %v1191
        %v1194 = vshrl.u32 %v1176, %v1192
        %v1195 = vor.u32 %v1193, %v1194
        %v1196 = vsub.s32 4294967266, %v1191
        %v1197 = vadd.s32 %v1196, 127
        %v1198 = vshll.u32 %v1197, 23
        %v1199 = vor.u32 4788187, %v1198
        %v1200 = vand.u32 2147483647, %v1199
        %v1202 = vcvt.s32.f32 %v1195
        %v1203 = vmul.f32 %v1202, %v1200
        %v1204 = vxor.u32 %v1203, 2147483648
        %v1205 = vsel %vm1122, %v1204, %v1203
        %v1206 = vsub.s32 4, %v1182
        %v1207 = vsel %vm1122, %v1206, %v1182
        %v1208 = vsel %vm1121, %v905, %v1205
        %v1209 = vsel %vm1121, 0, %v1207
        %v1210 = vcosq.f32.pop %v1208
        %v1211 = vsinq.f32.pop %v1208
        %vm1212 = vweird.f32 %v905
        %v1213 = vadd.s32 %v1209, 3
        %v1214 = vand.u32 %v1213, 3
        %vm1215 = vcmp.lt.s32.totalorder %v1214, 2
        %vm1216 = vcmp.eq.s32.totalorder %v1214, 0
        %v1217 = vxor.u32 %v1211, 2147483648
        %v1218 = vsel %vm1216, %v1210, %v1217
        %vm1219 = vcmp.eq.s32.totalorder %v1214, 2
        %v1220 = vxor.u32 %v1210, 2147483648
        %v1221 = vsel %vm1219, %v1220, %v1211
        %v1222 = vsel %vm1215, %v1218, %v1221
        %v1223 = vsel %vm1212, nan, %v1222
        %v1224 = vand.u32 2147483647, %v906
        %vm1225 = vcmp.le.f32.partialorder %v1224, 0.7853982
        %vm1226 = vcmp.lt.s32.totalorder %v906, 0
        %v1227 = vand.u32 %v906, 2139095040
        %v1228 = vshrl.u32 %v1227, 23
        %v1229 = vsub.s32 %v1228, 127
        %v1230 = vand.u32 2147483647, %v906
        %v1231 = vand.u32 %v1230, 8388607
        %v1232 = vor.u32 %v1231, 8388608
        %v1233 = vsub.s32 0, %v1232
        %v1234 = vadd.s32 %v1229, 1
        %vm1235 = vcmp.gt.s32.totalorder %v1234, 0
        %v1236 = vsel %vm1235, %v1234, 0
        %v1237 = vshrl.u32 %v1236, 5
        %v1238 = vand.u32 %v1236, 31
        %v1239 = vsub.s32 32, %v1238
        %v1240 = vshrl.u32 683565275, %v1239
        %v1241 = vshll.u32 683565275, %v1238
        %v1242 = vshrl.u32 2475754826, %v1239
        %v1243 = vor.u32 %v1241, %v1242
        %v1244 = vshll.u32 2475754826, %v1238
        %v1245 = vshrl.u32 2131351028, %v1239
        %v1246 = vor.u32 %v1244, %v1245
        %v1247 = vshll.u32 2131351028, %v1238
        %v1248 = vshrl.u32 2102212464, %v1239
        %v1249 = vor.u32 %v1247, %v1248
        %v1250 = vshll.u32 2102212464, %v1238
        %v1251 = vshrl.u32 920167782, %v1239
        %v1252 = vor.u32 %v1250, %v1251
        %v1253 = vshll.u32 920167782, %v1238
        %v1254 = vshrl.u32 1326507024, %v1239
        %v1255 = vor.u32 %v1253, %v1254
        %vm1256 = vcmp.lt.s32.totalorder %v1237, 1
        %vm1257 = vcmp.lt.s32.totalorder %v1237, 2
        %vm1258 = vcmp.lt.s32.totalorder %v1237, 3
        %vm1259 = vcmp.lt.s32.totalorder %v1237, 4
        %v1260 = vsel %vm1256, %v1240, %v1243
        %v1261 = vsel %vm1259, %v1249, 2102212464
        %v1262 = vsel %vm1258, %v1246, %v1261
        %v1263 = vsel %vm1257, %v1260, %v1262
        %v1264 = vsel %vm1256, %v1243, %v1246
        %v1265 = vsel %vm1259, %v1252, 920167782
        %v1266 = vsel %vm1258, %v1249, %v1265
        %v1267 = vsel %vm1257, %v1264, %v1266
        %v1268 = vsel %vm1256, %v1246, %v1249
        %v1269 = vsel %vm1259, %v1255, 1326507024
        %v1270 = vsel %vm1258, %v1252, %v1269
        %v1271 = vsel %vm1257, %v1268, %v1270
        %v1272 = vshll.u32 %v1232, 8
        %v1273 = vmul.u32.u64.compose %v1272, %v1271
        %v1274 = vextract.low.u32 %v1273
        %v1275 = vextract.high.u32 %v1273
        %v1276 = vmul.u32.u64.compose %v1272, %v1267
        %v1277 = vextract.low.u32 %v1276
        %v1278 = vextract.high.u32 %v1276
        %v1279 = vmul.u32 %v1272, %v1263
        %v1280 = vadd.s32 %v1275, %v1277
        %vm1281 = vc.u32 %v1275, %v1277
        %v1282 = vadd.s32 %v1278, 1
        %v1283 = vsel %vm1281, %v1282, %v1278
        %v1284 = vadd.s32 %v1279, %v1283
        %v1285 = vadd.s32 %v1284, 536870912
        %v1286 = vshrl.u32 %v1285, 30
        %v1287 = vshll.u32 %v1286, 30
        %v1288 = vsub.s32 %v1284, %v1287
        %vm1289 = vcmp.lt.s32.totalorder %v1288, 0
        %v1290 = vsub.s32 0, %v1288
        %v1291 = vsel %vm1289, %v1290, %v1288
        %v1292 = vclz %v1291
        %v1293 = vsub.s32 %v1292, 2
        %vm1294 = vcmp.gt.s32.totalorder 0, %v1293
        %v1295 = vsel %vm1294, 0, %v1293
        %v1296 = vsub.s32 32, %v1295
        %v1297 = vshll.u32 %v1288, %v1295
        %v1298 = vshrl.u32 %v1280, %v1296
        %v1299 = vor.u32 %v1297, %v1298
        %v1300 = vsub.s32 4294967266, %v1295
        %v1301 = vadd.s32 %v1300, 127
        %v1302 = vshll.u32 %v1301, 23
        %v1303 = vor.u32 4788187, %v1302
        %v1304 = vand.u32 2147483647, %v1303
        %v1306 = vcvt.s32.f32 %v1299
        %v1307 = vmul.f32 %v1306, %v1304
        %v1308 = vxor.u32 %v1307, 2147483648
        %v1309 = vsel %vm1226, %v1308, %v1307
        %v1310 = vsub.s32 4, %v1286
        %v1311 = vsel %vm1226, %v1310, %v1286
        %v1312 = vsel %vm1225, %v906, %v1309
        %v1313 = vsel %vm1225, 0, %v1311
        %v1314 = vcosq.f32.pop %v1312
        %v1315 = vsinq.f32.pop %v1312
        %vm1316 = vweird.f32 %v906
        %v1317 = vadd.s32 %v1313, 3
        %v1318 = vand.u32 %v1317, 3
        %vm1319 = vcmp.lt.s32.totalorder %v1318, 2
        %vm1320 = vcmp.eq.s32.totalorder %v1318, 0
        %v1321 = vxor.u32 %v1315, 2147483648
        %v1322 = vsel %vm1320, %v1314, %v1321
        %vm1323 = vcmp.eq.s32.totalorder %v1318, 2
        %v1324 = vxor.u32 %v1314, 2147483648
        %v1325 = vsel %vm1323, %v1324, %v1315
        %v1326 = vsel %vm1319, %v1322, %v1325
        %v1327 = vsel %vm1316, nan, %v1326
        %v1328 = vand.u32 2147483647, %v907
        %vm1329 = vcmp.le.f32.partialorder %v1328, 0.7853982
        %vm1330 = vcmp.lt.s32.totalorder %v907, 0
        %v1331 = vand.u32 %v907, 2139095040
        %v1332 = vshrl.u32 %v1331, 23
        %v1333 = vsub.s32 %v1332, 127
        %v1334 = vand.u32 2147483647, %v907
        %v1335 = vand.u32 %v1334, 8388607
        %v1336 = vor.u32 %v1335, 8388608
        %v1337 = vsub.s32 0, %v1336
        %v1338 = vadd.s32 %v1333, 1
        %vm1339 = vcmp.gt.s32.totalorder %v1338, 0
        %v1340 = vsel %vm1339, %v1338, 0
        %v1341 = vshrl.u32 %v1340, 5
        %v1342 = vand.u32 %v1340, 31
        %v1343 = vsub.s32 32, %v1342
        %v1344 = vshrl.u32 683565275, %v1343
        %v1345 = vshll.u32 683565275, %v1342
        %v1346 = vshrl.u32 2475754826, %v1343
        %v1347 = vor.u32 %v1345, %v1346
        %v1348 = vshll.u32 2475754826, %v1342
        %v1349 = vshrl.u32 2131351028, %v1343
        %v1350 = vor.u32 %v1348, %v1349
        %v1351 = vshll.u32 2131351028, %v1342
        %v1352 = vshrl.u32 2102212464, %v1343
        %v1353 = vor.u32 %v1351, %v1352
        %v1354 = vshll.u32 2102212464, %v1342
        %v1355 = vshrl.u32 920167782, %v1343
        %v1356 = vor.u32 %v1354, %v1355
        %v1357 = vshll.u32 920167782, %v1342
        %v1358 = vshrl.u32 1326507024, %v1343
        %v1359 = vor.u32 %v1357, %v1358
        %vm1360 = vcmp.lt.s32.totalorder %v1341, 1
        %vm1361 = vcmp.lt.s32.totalorder %v1341, 2
        %vm1362 = vcmp.lt.s32.totalorder %v1341, 3
        %vm1363 = vcmp.lt.s32.totalorder %v1341, 4
        %v1364 = vsel %vm1360, %v1344, %v1347
        %v1365 = vsel %vm1363, %v1353, 2102212464
        %v1366 = vsel %vm1362, %v1350, %v1365
        %v1367 = vsel %vm1361, %v1364, %v1366
        %v1368 = vsel %vm1360, %v1347, %v1350
        %v1369 = vsel %vm1363, %v1356, 920167782
        %v1370 = vsel %vm1362, %v1353, %v1369
        %v1371 = vsel %vm1361, %v1368, %v1370
        %v1372 = vsel %vm1360, %v1350, %v1353
        %v1373 = vsel %vm1363, %v1359, 1326507024
        %v1374 = vsel %vm1362, %v1356, %v1373
        %v1375 = vsel %vm1361, %v1372, %v1374
        %v1376 = vshll.u32 %v1336, 8
        %v1377 = vmul.u32.u64.compose %v1376, %v1375
        %v1378 = vextract.low.u32 %v1377
        %v1379 = vextract.high.u32 %v1377
        %v1380 = vmul.u32.u64.compose %v1376, %v1371
        %v1381 = vextract.low.u32 %v1380
        %v1382 = vextract.high.u32 %v1380
        %v1383 = vmul.u32 %v1376, %v1367
        %v1384 = vadd.s32 %v1379, %v1381
        %vm1385 = vc.u32 %v1379, %v1381
        %v1386 = vadd.s32 %v1382, 1
        %v1387 = vsel %vm1385, %v1386, %v1382
        %v1388 = vadd.s32 %v1383, %v1387
        %v1389 = vadd.s32 %v1388, 536870912
        %v1390 = vshrl.u32 %v1389, 30
        %v1391 = vshll.u32 %v1390, 30
        %v1392 = vsub.s32 %v1388, %v1391
        %vm1393 = vcmp.lt.s32.totalorder %v1392, 0
        %v1394 = vsub.s32 0, %v1392
        %v1395 = vsel %vm1393, %v1394, %v1392
        %v1396 = vclz %v1395
        %v1397 = vsub.s32 %v1396, 2
        %vm1398 = vcmp.gt.s32.totalorder 0, %v1397
        %v1399 = vsel %vm1398, 0, %v1397
        %v1400 = vsub.s32 32, %v1399
        %v1401 = vshll.u32 %v1392, %v1399
        %v1402 = vshrl.u32 %v1384, %v1400
        %v1403 = vor.u32 %v1401, %v1402
        %v1404 = vsub.s32 4294967266, %v1399
        %v1405 = vadd.s32 %v1404, 127
        %v1406 = vshll.u32 %v1405, 23
        %v1407 = vor.u32 4788187, %v1406
        %v1408 = vand.u32 2147483647, %v1407
        %v1410 = vcvt.s32.f32 %v1403
        %v1411 = vmul.f32 %v1410, %v1408
        %v1412 = vxor.u32 %v1411, 2147483648
        %v1413 = vsel %vm1330, %v1412, %v1411
        %v1414 = vsub.s32 4, %v1390
        %v1415 = vsel %vm1330, %v1414, %v1390
        %v1416 = vsel %vm1329, %v907, %v1413
        %v1417 = vsel %vm1329, 0, %v1415
        %v1418 = vcosq.f32.pop %v1416
        %v1419 = vsinq.f32.pop %v1416
        %vm1420 = vweird.f32 %v907
        %v1421 = vadd.s32 %v1417, 3
        %v1422 = vand.u32 %v1421, 3
        %vm1423 = vcmp.lt.s32.totalorder %v1422, 2
        %vm1424 = vcmp.eq.s32.totalorder %v1422, 0
        %v1425 = vxor.u32 %v1419, 2147483648
        %v1426 = vsel %vm1424, %v1418, %v1425
        %vm1427 = vcmp.eq.s32.totalorder %v1422, 2
        %v1428 = vxor.u32 %v1418, 2147483648
        %v1429 = vsel %vm1427, %v1428, %v1419
        %v1430 = vsel %vm1423, %v1426, %v1429
        %v1431 = vsel %vm1420, nan, %v1430
        %v1432 = vand.u32 2147483647, %v908
        %vm1433 = vcmp.le.f32.partialorder %v1432, 0.7853982
        %vm1434 = vcmp.lt.s32.totalorder %v908, 0
        %v1435 = vand.u32 %v908, 2139095040
        %v1436 = vshrl.u32 %v1435, 23
        %v1437 = vsub.s32 %v1436, 127
        %v1438 = vand.u32 2147483647, %v908
        %v1439 = vand.u32 %v1438, 8388607
        %v1440 = vor.u32 %v1439, 8388608
        %v1441 = vsub.s32 0, %v1440
        %v1442 = vadd.s32 %v1437, 1
        %vm1443 = vcmp.gt.s32.totalorder %v1442, 0
        %v1444 = vsel %vm1443, %v1442, 0
        %v1445 = vshrl.u32 %v1444, 5
        %v1446 = vand.u32 %v1444, 31
        %v1447 = vsub.s32 32, %v1446
        %v1448 = vshrl.u32 683565275, %v1447
        %v1449 = vshll.u32 683565275, %v1446
        %v1450 = vshrl.u32 2475754826, %v1447
        %v1451 = vor.u32 %v1449, %v1450
        %v1452 = vshll.u32 2475754826, %v1446
        %v1453 = vshrl.u32 2131351028, %v1447
        %v1454 = vor.u32 %v1452, %v1453
        %v1455 = vshll.u32 2131351028, %v1446
        %v1456 = vshrl.u32 2102212464, %v1447
        %v1457 = vor.u32 %v1455, %v1456
        %v1458 = vshll.u32 2102212464, %v1446
        %v1459 = vshrl.u32 920167782, %v1447
        %v1460 = vor.u32 %v1458, %v1459
        %v1461 = vshll.u32 920167782, %v1446
        %v1462 = vshrl.u32 1326507024, %v1447
        %v1463 = vor.u32 %v1461, %v1462
        %vm1464 = vcmp.lt.s32.totalorder %v1445, 1
        %vm1465 = vcmp.lt.s32.totalorder %v1445, 2
        %vm1466 = vcmp.lt.s32.totalorder %v1445, 3
        %vm1467 = vcmp.lt.s32.totalorder %v1445, 4
        %v1468 = vsel %vm1464, %v1448, %v1451
        %v1469 = vsel %vm1467, %v1457, 2102212464
        %v1470 = vsel %vm1466, %v1454, %v1469
        %v1471 = vsel %vm1465, %v1468, %v1470
        %v1472 = vsel %vm1464, %v1451, %v1454
        %v1473 = vsel %vm1467, %v1460, 920167782
        %v1474 = vsel %vm1466, %v1457, %v1473
        %v1475 = vsel %vm1465, %v1472, %v1474
        %v1476 = vsel %vm1464, %v1454, %v1457
        %v1477 = vsel %vm1467, %v1463, 1326507024
        %v1478 = vsel %vm1466, %v1460, %v1477
        %v1479 = vsel %vm1465, %v1476, %v1478
        %v1480 = vshll.u32 %v1440, 8
        %v1481 = vmul.u32.u64.compose %v1480, %v1479
        %v1482 = vextract.low.u32 %v1481
        %v1483 = vextract.high.u32 %v1481
        %v1484 = vmul.u32.u64.compose %v1480, %v1475
        %v1485 = vextract.low.u32 %v1484
        %v1486 = vextract.high.u32 %v1484
        %v1487 = vmul.u32 %v1480, %v1471
        %v1488 = vadd.s32 %v1483, %v1485
        %vm1489 = vc.u32 %v1483, %v1485
        %v1490 = vadd.s32 %v1486, 1
        %v1491 = vsel %vm1489, %v1490, %v1486
        %v1492 = vadd.s32 %v1487, %v1491
        %v1493 = vadd.s32 %v1492, 536870912
        %v1494 = vshrl.u32 %v1493, 30
        %v1495 = vshll.u32 %v1494, 30
        %v1496 = vsub.s32 %v1492, %v1495
        %vm1497 = vcmp.lt.s32.totalorder %v1496, 0
        %v1498 = vsub.s32 0, %v1496
        %v1499 = vsel %vm1497, %v1498, %v1496
        %v1500 = vclz %v1499
        %v1501 = vsub.s32 %v1500, 2
        %vm1502 = vcmp.gt.s32.totalorder 0, %v1501
        %v1503 = vsel %vm1502, 0, %v1501
        %v1504 = vsub.s32 32, %v1503
        %v1505 = vshll.u32 %v1496, %v1503
        %v1506 = vshrl.u32 %v1488, %v1504
        %v1507 = vor.u32 %v1505, %v1506
        %v1508 = vsub.s32 4294967266, %v1503
        %v1509 = vadd.s32 %v1508, 127
        %v1510 = vshll.u32 %v1509, 23
        %v1511 = vor.u32 4788187, %v1510
        %v1512 = vand.u32 2147483647, %v1511
        %v1514 = vcvt.s32.f32 %v1507
        %v1515 = vmul.f32 %v1514, %v1512
        %v1516 = vxor.u32 %v1515, 2147483648
        %v1517 = vsel %vm1434, %v1516, %v1515
        %v1518 = vsub.s32 4, %v1494
        %v1519 = vsel %vm1434, %v1518, %v1494
        %v1520 = vsel %vm1433, %v908, %v1517
        %v1521 = vsel %vm1433, 0, %v1519
        %v1522 = vcosq.f32.pop %v1520
        %v1523 = vsinq.f32.pop %v1520
        %vm1524 = vweird.f32 %v908
        %v1525 = vadd.s32 %v1521, 3
        %v1526 = vand.u32 %v1525, 3
        %vm1527 = vcmp.lt.s32.totalorder %v1526, 2
        %vm1528 = vcmp.eq.s32.totalorder %v1526, 0
        %v1529 = vxor.u32 %v1523, 2147483648
        %v1530 = vsel %vm1528, %v1522, %v1529
        %vm1531 = vcmp.eq.s32.totalorder %v1526, 2
        %v1532 = vxor.u32 %v1522, 2147483648
        %v1533 = vsel %vm1531, %v1532, %v1523
        %v1534 = vsel %vm1527, %v1530, %v1533
        %v1535 = vsel %vm1524, nan, %v1534
        %v1536 = vand.u32 2147483647, %v909
        %vm1537 = vcmp.le.f32.partialorder %v1536, 0.7853982
        %vm1538 = vcmp.lt.s32.totalorder %v909, 0
        %v1539 = vand.u32 %v909, 2139095040
        %v1540 = vshrl.u32 %v1539, 23
        %v1541 = vsub.s32 %v1540, 127
        %v1542 = vand.u32 2147483647, %v909
        %v1543 = vand.u32 %v1542, 8388607
        %v1544 = vor.u32 %v1543, 8388608
        %v1545 = vsub.s32 0, %v1544
        %v1546 = vadd.s32 %v1541, 1
        %vm1547 = vcmp.gt.s32.totalorder %v1546, 0
        %v1548 = vsel %vm1547, %v1546, 0
        %v1549 = vshrl.u32 %v1548, 5
        %v1550 = vand.u32 %v1548, 31
        %v1551 = vsub.s32 32, %v1550
        %v1552 = vshrl.u32 683565275, %v1551
        %v1553 = vshll.u32 683565275, %v1550
        %v1554 = vshrl.u32 2475754826, %v1551
        %v1555 = vor.u32 %v1553, %v1554
        %v1556 = vshll.u32 2475754826, %v1550
        %v1557 = vshrl.u32 2131351028, %v1551
        %v1558 = vor.u32 %v1556, %v1557
        %v1559 = vshll.u32 2131351028, %v1550
        %v1560 = vshrl.u32 2102212464, %v1551
        %v1561 = vor.u32 %v1559, %v1560
        %v1562 = vshll.u32 2102212464, %v1550
        %v1563 = vshrl.u32 920167782, %v1551
        %v1564 = vor.u32 %v1562, %v1563
        %v1565 = vshll.u32 920167782, %v1550
        %v1566 = vshrl.u32 1326507024, %v1551
        %v1567 = vor.u32 %v1565, %v1566
        %vm1568 = vcmp.lt.s32.totalorder %v1549, 1
        %vm1569 = vcmp.lt.s32.totalorder %v1549, 2
        %vm1570 = vcmp.lt.s32.totalorder %v1549, 3
        %vm1571 = vcmp.lt.s32.totalorder %v1549, 4
        %v1572 = vsel %vm1568, %v1552, %v1555
        %v1573 = vsel %vm1571, %v1561, 2102212464
        %v1574 = vsel %vm1570, %v1558, %v1573
        %v1575 = vsel %vm1569, %v1572, %v1574
        %v1576 = vsel %vm1568, %v1555, %v1558
        %v1577 = vsel %vm1571, %v1564, 920167782
        %v1578 = vsel %vm1570, %v1561, %v1577
        %v1579 = vsel %vm1569, %v1576, %v1578
        %v1580 = vsel %vm1568, %v1558, %v1561
        %v1581 = vsel %vm1571, %v1567, 1326507024
        %v1582 = vsel %vm1570, %v1564, %v1581
        %v1583 = vsel %vm1569, %v1580, %v1582
        %v1584 = vshll.u32 %v1544, 8
        %v1585 = vmul.u32.u64.compose %v1584, %v1583
        %v1586 = vextract.low.u32 %v1585
        %v1587 = vextract.high.u32 %v1585
        %v1588 = vmul.u32.u64.compose %v1584, %v1579
        %v1589 = vextract.low.u32 %v1588
        %v1590 = vextract.high.u32 %v1588
        %v1591 = vmul.u32 %v1584, %v1575
        %v1592 = vadd.s32 %v1587, %v1589
        %vm1593 = vc.u32 %v1587, %v1589
        %v1594 = vadd.s32 %v1590, 1
        %v1595 = vsel %vm1593, %v1594, %v1590
        %v1596 = vadd.s32 %v1591, %v1595
        %v1597 = vadd.s32 %v1596, 536870912
        %v1598 = vshrl.u32 %v1597, 30
        %v1599 = vshll.u32 %v1598, 30
        %v1600 = vsub.s32 %v1596, %v1599
        %vm1601 = vcmp.lt.s32.totalorder %v1600, 0
        %v1602 = vsub.s32 0, %v1600
        %v1603 = vsel %vm1601, %v1602, %v1600
        %v1604 = vclz %v1603
        %v1605 = vsub.s32 %v1604, 2
        %vm1606 = vcmp.gt.s32.totalorder 0, %v1605
        %v1607 = vsel %vm1606, 0, %v1605
        %v1608 = vsub.s32 32, %v1607
        %v1609 = vshll.u32 %v1600, %v1607
        %v1610 = vshrl.u32 %v1592, %v1608
        %v1611 = vor.u32 %v1609, %v1610
        %v1612 = vsub.s32 4294967266, %v1607
        %v1613 = vadd.s32 %v1612, 127
        %v1614 = vshll.u32 %v1613, 23
        %v1615 = vor.u32 4788187, %v1614
        %v1616 = vand.u32 2147483647, %v1615
        %v1618 = vcvt.s32.f32 %v1611
        %v1619 = vmul.f32 %v1618, %v1616
        %v1620 = vxor.u32 %v1619, 2147483648
        %v1621 = vsel %vm1538, %v1620, %v1619
        %v1622 = vsub.s32 4, %v1598
        %v1623 = vsel %vm1538, %v1622, %v1598
        %v1624 = vsel %vm1537, %v909, %v1621
        %v1625 = vsel %vm1537, 0, %v1623
        %v1626 = vcosq.f32.pop %v1624
        %v1627 = vsinq.f32.pop %v1624
        %vm1628 = vweird.f32 %v909
        %v1629 = vadd.s32 %v1625, 3
        %v1630 = vand.u32 %v1629, 3
        %vm1631 = vcmp.lt.s32.totalorder %v1630, 2
        %vm1632 = vcmp.eq.s32.totalorder %v1630, 0
        %v1633 = vxor.u32 %v1627, 2147483648
        %v1634 = vsel %vm1632, %v1626, %v1633
        %vm1635 = vcmp.eq.s32.totalorder %v1630, 2
        %v1636 = vxor.u32 %v1626, 2147483648
        %v1637 = vsel %vm1635, %v1636, %v1627
        %v1638 = vsel %vm1631, %v1634, %v1637
        %v1639 = vsel %vm1628, nan, %v1638
        %v1640 = vand.u32 2147483647, %v910
        %vm1641 = vcmp.le.f32.partialorder %v1640, 0.7853982
        %vm1642 = vcmp.lt.s32.totalorder %v910, 0
        %v1643 = vand.u32 %v910, 2139095040
        %v1644 = vshrl.u32 %v1643, 23
        %v1645 = vsub.s32 %v1644, 127
        %v1646 = vand.u32 2147483647, %v910
        %v1647 = vand.u32 %v1646, 8388607
        %v1648 = vor.u32 %v1647, 8388608
        %v1649 = vsub.s32 0, %v1648
        %v1650 = vadd.s32 %v1645, 1
        %vm1651 = vcmp.gt.s32.totalorder %v1650, 0
        %v1652 = vsel %vm1651, %v1650, 0
        %v1653 = vshrl.u32 %v1652, 5
        %v1654 = vand.u32 %v1652, 31
        %v1655 = vsub.s32 32, %v1654
        %v1656 = vshrl.u32 683565275, %v1655
        %v1657 = vshll.u32 683565275, %v1654
        %v1658 = vshrl.u32 2475754826, %v1655
        %v1659 = vor.u32 %v1657, %v1658
        %v1660 = vshll.u32 2475754826, %v1654
        %v1661 = vshrl.u32 2131351028, %v1655
        %v1662 = vor.u32 %v1660, %v1661
        %v1663 = vshll.u32 2131351028, %v1654
        %v1664 = vshrl.u32 2102212464, %v1655
        %v1665 = vor.u32 %v1663, %v1664
        %v1666 = vshll.u32 2102212464, %v1654
        %v1667 = vshrl.u32 920167782, %v1655
        %v1668 = vor.u32 %v1666, %v1667
        %v1669 = vshll.u32 920167782, %v1654
        %v1670 = vshrl.u32 1326507024, %v1655
        %v1671 = vor.u32 %v1669, %v1670
        %vm1672 = vcmp.lt.s32.totalorder %v1653, 1
        %vm1673 = vcmp.lt.s32.totalorder %v1653, 2
        %vm1674 = vcmp.lt.s32.totalorder %v1653, 3
        %vm1675 = vcmp.lt.s32.totalorder %v1653, 4
        %v1676 = vsel %vm1672, %v1656, %v1659
        %v1677 = vsel %vm1675, %v1665, 2102212464
        %v1678 = vsel %vm1674, %v1662, %v1677
        %v1679 = vsel %vm1673, %v1676, %v1678
        %v1680 = vsel %vm1672, %v1659, %v1662
        %v1681 = vsel %vm1675, %v1668, 920167782
        %v1682 = vsel %vm1674, %v1665, %v1681
        %v1683 = vsel %vm1673, %v1680, %v1682
        %v1684 = vsel %vm1672, %v1662, %v1665
        %v1685 = vsel %vm1675, %v1671, 1326507024
        %v1686 = vsel %vm1674, %v1668, %v1685
        %v1687 = vsel %vm1673, %v1684, %v1686
        %v1688 = vshll.u32 %v1648, 8
        %v1689 = vmul.u32.u64.compose %v1688, %v1687
        %v1690 = vextract.low.u32 %v1689
        %v1691 = vextract.high.u32 %v1689
        %v1692 = vmul.u32.u64.compose %v1688, %v1683
        %v1693 = vextract.low.u32 %v1692
        %v1694 = vextract.high.u32 %v1692
        %v1695 = vmul.u32 %v1688, %v1679
        %v1696 = vadd.s32 %v1691, %v1693
        %vm1697 = vc.u32 %v1691, %v1693
        %v1698 = vadd.s32 %v1694, 1
        %v1699 = vsel %vm1697, %v1698, %v1694
        %v1700 = vadd.s32 %v1695, %v1699
        %v1701 = vadd.s32 %v1700, 536870912
        %v1702 = vshrl.u32 %v1701, 30
        %v1703 = vshll.u32 %v1702, 30
        %v1704 = vsub.s32 %v1700, %v1703
        %vm1705 = vcmp.lt.s32.totalorder %v1704, 0
        %v1706 = vsub.s32 0, %v1704
        %v1707 = vsel %vm1705, %v1706, %v1704
        %v1708 = vclz %v1707
        %v1709 = vsub.s32 %v1708, 2
        %vm1710 = vcmp.gt.s32.totalorder 0, %v1709
        %v1711 = vsel %vm1710, 0, %v1709
        %v1712 = vsub.s32 32, %v1711
        %v1713 = vshll.u32 %v1704, %v1711
        %v1714 = vshrl.u32 %v1696, %v1712
        %v1715 = vor.u32 %v1713, %v1714
        %v1716 = vsub.s32 4294967266, %v1711
        %v1717 = vadd.s32 %v1716, 127
        %v1718 = vshll.u32 %v1717, 23
        %v1719 = vor.u32 4788187, %v1718
        %v1720 = vand.u32 2147483647, %v1719
        %v1722 = vcvt.s32.f32 %v1715
        %v1723 = vmul.f32 %v1722, %v1720
        %v1724 = vxor.u32 %v1723, 2147483648
        %v1725 = vsel %vm1642, %v1724, %v1723
        %v1726 = vsub.s32 4, %v1702
        %v1727 = vsel %vm1642, %v1726, %v1702
        %v1728 = vsel %vm1641, %v910, %v1725
        %v1729 = vsel %vm1641, 0, %v1727
        %v1730 = vcosq.f32.pop %v1728
        %v1731 = vsinq.f32.pop %v1728
        %vm1732 = vweird.f32 %v910
        %v1733 = vadd.s32 %v1729, 3
        %v1734 = vand.u32 %v1733, 3
        %vm1735 = vcmp.lt.s32.totalorder %v1734, 2
        %vm1736 = vcmp.eq.s32.totalorder %v1734, 0
        %v1737 = vxor.u32 %v1731, 2147483648
        %v1738 = vsel %vm1736, %v1730, %v1737
        %vm1739 = vcmp.eq.s32.totalorder %v1734, 2
        %v1740 = vxor.u32 %v1730, 2147483648
        %v1741 = vsel %vm1739, %v1740, %v1731
        %v1742 = vsel %vm1735, %v1738, %v1741
        %v1743 = vsel %vm1732, nan, %v1742
        %v1744 = vand.u32 2147483647, %v911
        %vm1745 = vcmp.le.f32.partialorder %v1744, 0.7853982
        %vm1746 = vcmp.lt.s32.totalorder %v911, 0
        %v1747 = vand.u32 %v911, 2139095040
        %v1748 = vshrl.u32 %v1747, 23
        %v1749 = vsub.s32 %v1748, 127
        %v1750 = vand.u32 2147483647, %v911
        %v1751 = vand.u32 %v1750, 8388607
        %v1752 = vor.u32 %v1751, 8388608
        %v1753 = vsub.s32 0, %v1752
        %v1754 = vadd.s32 %v1749, 1
        %vm1755 = vcmp.gt.s32.totalorder %v1754, 0
        %v1756 = vsel %vm1755, %v1754, 0
        %v1757 = vshrl.u32 %v1756, 5
        %v1758 = vand.u32 %v1756, 31
        %v1759 = vsub.s32 32, %v1758
        %v1760 = vshrl.u32 683565275, %v1759
        %v1761 = vshll.u32 683565275, %v1758
        %v1762 = vshrl.u32 2475754826, %v1759
        %v1763 = vor.u32 %v1761, %v1762
        %v1764 = vshll.u32 2475754826, %v1758
        %v1765 = vshrl.u32 2131351028, %v1759
        %v1766 = vor.u32 %v1764, %v1765
        %v1767 = vshll.u32 2131351028, %v1758
        %v1768 = vshrl.u32 2102212464, %v1759
        %v1769 = vor.u32 %v1767, %v1768
        %v1770 = vshll.u32 2102212464, %v1758
        %v1771 = vshrl.u32 920167782, %v1759
        %v1772 = vor.u32 %v1770, %v1771
        %v1773 = vshll.u32 920167782, %v1758
        %v1774 = vshrl.u32 1326507024, %v1759
        %v1775 = vor.u32 %v1773, %v1774
        %vm1776 = vcmp.lt.s32.totalorder %v1757, 1
        %vm1777 = vcmp.lt.s32.totalorder %v1757, 2
        %vm1778 = vcmp.lt.s32.totalorder %v1757, 3
        %vm1779 = vcmp.lt.s32.totalorder %v1757, 4
        %v1780 = vsel %vm1776, %v1760, %v1763
        %v1781 = vsel %vm1779, %v1769, 2102212464
        %v1782 = vsel %vm1778, %v1766, %v1781
        %v1783 = vsel %vm1777, %v1780, %v1782
        %v1784 = vsel %vm1776, %v1763, %v1766
        %v1785 = vsel %vm1779, %v1772, 920167782
        %v1786 = vsel %vm1778, %v1769, %v1785
        %v1787 = vsel %vm1777, %v1784, %v1786
        %v1788 = vsel %vm1776, %v1766, %v1769
        %v1789 = vsel %vm1779, %v1775, 1326507024
        %v1790 = vsel %vm1778, %v1772, %v1789
        %v1791 = vsel %vm1777, %v1788, %v1790
        %v1792 = vshll.u32 %v1752, 8
        %v1793 = vmul.u32.u64.compose %v1792, %v1791
        %v1794 = vextract.low.u32 %v1793
        %v1795 = vextract.high.u32 %v1793
        %v1796 = vmul.u32.u64.compose %v1792, %v1787
        %v1797 = vextract.low.u32 %v1796
        %v1798 = vextract.high.u32 %v1796
        %v1799 = vmul.u32 %v1792, %v1783
        %v1800 = vadd.s32 %v1795, %v1797
        %vm1801 = vc.u32 %v1795, %v1797
        %v1802 = vadd.s32 %v1798, 1
        %v1803 = vsel %vm1801, %v1802, %v1798
        %v1804 = vadd.s32 %v1799, %v1803
        %v1805 = vadd.s32 %v1804, 536870912
        %v1806 = vshrl.u32 %v1805, 30
        %v1807 = vshll.u32 %v1806, 30
        %v1808 = vsub.s32 %v1804, %v1807
        %vm1809 = vcmp.lt.s32.totalorder %v1808, 0
        %v1810 = vsub.s32 0, %v1808
        %v1811 = vsel %vm1809, %v1810, %v1808
        %v1812 = vclz %v1811
        %v1813 = vsub.s32 %v1812, 2
        %vm1814 = vcmp.gt.s32.totalorder 0, %v1813
        %v1815 = vsel %vm1814, 0, %v1813
        %v1816 = vsub.s32 32, %v1815
        %v1817 = vshll.u32 %v1808, %v1815
        %v1818 = vshrl.u32 %v1800, %v1816
        %v1819 = vor.u32 %v1817, %v1818
        %v1820 = vsub.s32 4294967266, %v1815
        %v1821 = vadd.s32 %v1820, 127
        %v1822 = vshll.u32 %v1821, 23
        %v1823 = vor.u32 4788187, %v1822
        %v1824 = vand.u32 2147483647, %v1823
        %v1826 = vcvt.s32.f32 %v1819
        %v1827 = vmul.f32 %v1826, %v1824
        %v1828 = vxor.u32 %v1827, 2147483648
        %v1829 = vsel %vm1746, %v1828, %v1827
        %v1830 = vsub.s32 4, %v1806
        %v1831 = vsel %vm1746, %v1830, %v1806
        %v1832 = vsel %vm1745, %v911, %v1829
        %v1833 = vsel %vm1745, 0, %v1831
        %v1834 = vcosq.f32.pop %v1832
        %v1835 = vsinq.f32.pop %v1832
        %vm1836 = vweird.f32 %v911
        %v1837 = vadd.s32 %v1833, 3
        %v1838 = vand.u32 %v1837, 3
        %vm1839 = vcmp.lt.s32.totalorder %v1838, 2
        %vm1840 = vcmp.eq.s32.totalorder %v1838, 0
        %v1841 = vxor.u32 %v1835, 2147483648
        %v1842 = vsel %vm1840, %v1834, %v1841
        %vm1843 = vcmp.eq.s32.totalorder %v1838, 2
        %v1844 = vxor.u32 %v1834, 2147483648
        %v1845 = vsel %vm1843, %v1844, %v1835
        %v1846 = vsel %vm1839, %v1842, %v1845
        %v1847 = vsel %vm1836, nan, %v1846
        %v1848 = vmul.f32 %v1015, 0.1
        %v1849 = vmul.f32 %v1119, 0.1
        %v1850 = vmul.f32 %v1223, 0.1
        %v1851 = vmul.f32 %v1327, 0.1
        %v1852 = vmul.f32 %v1431, 0.1
        %v1853 = vmul.f32 %v1535, 0.1
        %v1854 = vmul.f32 %v1639, 0.1
        %v1855 = vmul.f32 %v1743, 0.1
        %v1856 = vmul.f32 %v1847, 0.1
        %s1857 = sld [smem:[#allocation9]]
        %v1858 = vstv %s1857
        %v1859 = vmul.f32 %v1858, %v1848
        %s1860 = sld [smem:[#allocation9 + $0x1]]
        %v1861 = vstv %s1860
        %v1862 = vmul.f32 %v1861, %v1849
        %v1863 = vadd.f32 %v1859, %v1862
        %s1864 = sld [smem:[#allocation9 + $0x2]]
        %v1865 = vstv %s1864
        %v1866 = vmul.f32 %v1865, %v1850
        %v1867 = vadd.f32 %v1863, %v1866
        %s1868 = sld [smem:[#allocation9 + $0x3]]
        %v1869 = vstv %s1868
        %v1870 = vmul.f32 %v1869, %v1851
        %v1871 = vadd.f32 %v1867, %v1870
        %s1872 = sld [smem:[#allocation9 + $0x4]]
        %v1873 = vstv %s1872
        %v1874 = vmul.f32 %v1873, %v1852
        %v1875 = vadd.f32 %v1871, %v1874
        %s1876 = sld [smem:[#allocation9 + $0x5]]
        %v1877 = vstv %s1876
        %v1878 = vmul.f32 %v1877, %v1853
        %v1879 = vadd.f32 %v1875, %v1878
        %s1880 = sld [smem:[#allocation9 + $0x6]]
        %v1881 = vstv %s1880
        %v1882 = vmul.f32 %v1881, %v1854
        %v1883 = vadd.f32 %v1879, %v1882
        %s1884 = sld [smem:[#allocation9 + $0x7]]
        %v1885 = vstv %s1884
        %v1886 = vmul.f32 %v1885, %v1855
        %v1887 = vadd.f32 %v1883, %v1886
        %s1888 = sld [smem:[#allocation9 + $0x8]]
        %v1889 = vstv %s1888
        %v1890 = vmul.f32 %v1889, %v1856
        %v1891 = vadd.f32 %v1887, %v1890
        %vm1892 = vcmp.gt.f32.partialorder %v256, 0.0
        %v1893 = vsel %vm1892, 1, 0
        %v1894 = vcvt.s32.f32 %v1893
        %v1895 = vmul.f32 %v1894, 0.003
        %v1896 = vsub.f32 1.0, %v1894
        %v1897 = vmul.f32 %v1896, 0.033333335
        %v1898 = vadd.f32 %v1895, %v1897
        %v1899 = vmul.f32 %v1891, %v1894
        %v1900 = vld [vmem:[%s224] sm:$0x1]
        %v1901 = vmul.f32 %v1898, %v1900
        %v1902 = vadd.f32 %v1899, %v1901
        %s1903 = sld [smem:[#allocation2]]
        %v1904 = vstv %s1903
        %v1905 = vadd.f32 %v1902, %v1904
        %v1906 = vtanh.pop %v1905
        %1907 = vst [vmem:[%s255] sm:$0x1] %v1906
        %s1908 = sand.u32 %s128, 1
        %s1909 = scalar_lea.sflag [#allocation5], %s1908
        %s1910 = sand.u32 %s128, 1
        %s1911 = scalar_lea.vmem [#allocation10], %s1910
        // Predicated region
        $region49: #{tpu_custom_call.1} parent=35 // pred_check
          %p1912 = pneg %p138
        $region50: #{tpu_custom_call.1} parent=35 // pred_check_branch
          %1914 = sbr.rel (%p1912) target = $region52
        $region51: #{tpu_custom_call.1} parent=35 // pred_region
          %s1916 = ssub.s32 16, 16
          %1917 = vsyncadd %s1909, %s1916
          %s1918 = smul.addr %s26, 16
          %s1919 = scalar_lea.hbm %s4, %s1918
          %s1921 = sshll.u32 %s1911, 4
          %s1922 = int_to_ptr.vmem [resolvable:$true] %s1921
          %1924 = dma.vmem_to_hbm [thread:$0]  %s1922, 16, %s1919, %s1909
        $region52: #{tpu_custom_call.1} parent=35 // pred_fallthru
          _
      $region36: #{tpu_custom_call.1} parent=5 // pred_fallthru
        _
      %p1925 = scmp.le.s32.totalorder 2, %s21
      // Predicated region
      $region53: #{tpu_custom_call.1} parent=5 // pred_check
        %p1926 = pneg %p1925
      $region54: #{tpu_custom_call.1} parent=5 // pred_check_branch
        %1928 = sbr.rel (%p1926) target = $region56
      $region55: #{tpu_custom_call.1} parent=5 // pred_region
        %s1929 = ssub.s32 %s21, 2
        // Predicated region
        $region57: #{tpu_custom_call.1} parent=55 // pred_check
          %p1930 = pneg %p144
        $region58: #{tpu_custom_call.1} parent=55 // pred_check_branch
          %1932 = sbr.rel (%p1930) target = $region60
        $region59: #{tpu_custom_call.1} parent=55 // pred_region
          %s1933 = sand.u32 %s129, 1
          %s1934 = scalar_lea.sflag [#allocation5], %s1933
          %s1935 = sand.u32 %s129, 1
          %s1936 = scalar_lea.vmem [#allocation10], %s1935
          %1937 = dma.done %s1934, 16
        $region60: #{tpu_custom_call.1} parent=55 // pred_fallthru
          _
      $region56: #{tpu_custom_call.1} parent=5 // pred_fallthru
        _
    $region6: #{tpu_custom_call.1} parent=1 // loop_footer
      %s25 = sadd.s32 1, %s21
    $region7: #{tpu_custom_call.1} parent=1 // loop_footer_branch
      %20 = sbr.rel target = $region3
    $region8: #{tpu_custom_call.1} parent=1 // loop_exit
      _
    %1938 = vsyncpa [#allocation4], 1
    %s1939 = scalar_lea.sflag [#allocation4], 1
    %1940 = vsyncpa %s1939, 1
    %1941 = vsyncpa [#allocation8], 1
    %s1942 = scalar_lea.sflag [#allocation8], 1
    %1943 = vsyncpa %s1942, 1
    %1944 = vsyncpa [#allocation5], 1
    %s1945 = scalar_lea.sflag [#allocation5], 1
    %1946 = vsyncpa %s1945, 1
    %1947 = vsyncpa [#allocation6], 1
    %s1948 = scalar_lea.sflag [#allocation6], 1
    %1949 = vsyncpa %s1948, 1

</llo_original>
